<compile_context>
chip_gen: v6e
topology: v6e:2x2x1
jax: 0.10.0
libtpu: 0.0.40
codegen_flags: <defaults>
</compile_context>

<pallas_src>
import jax
import jax.numpy as jnp
import numpy as np
from jax import lax
from jax.experimental import pallas as pl
from jax.experimental.pallas import tpu as pltpu

# ----------------------------- config (module __init__ args) -----------------
S = 7
B = 2
C = 20
D = B * 5 + C                 # 30 channels
LAMBDA_COORD = 5.0
LAMBDA_NOOBJ = 0.5
EPS = 1e-6                    # IoU denominator epsilon (get_iou assumption)

CW = 256                      # lanes per in-kernel chunk (8*CW = 2048 cells)
NC_PER_BLOCK = 4              # chunks per grid block (up to 8192 cells/block)


def _round_up(x, m):
    return ((x + m - 1) // m) * m


# ----------------------------- Pallas kernel ---------------------------------
def _yolo_loss_kernel(p_ref, t_ref, out_ref):
    """p_ref/t_ref: (D, nc, 8, CW) channel-major blocks; out_ref: (1,1) SMEM."""
    nc = p_ref.shape[1]
    sub, lanes = p_ref.shape[2], p_ref.shape[3]
    inv_s = jnp.float32(1.0 / S)

    def chunk_loss(j, acc):
        def ld(ref, c):
            return ref[c, j]                      # dense (8, CW) tile

        # is_object: target confidence of box 0 > 0
        is_obj = (ld(t_ref, 4) > 0.0).astype(jnp.float32)

        def box_iou(b):
            o = 5 * b
            px, py = ld(p_ref, o), ld(p_ref, o + 1)
            pw, ph = ld(p_ref, o + 2), ld(p_ref, o + 3)
            tx, ty = ld(t_ref, o), ld(t_ref, o + 1)
            tw, th = ld(t_ref, o + 2), ld(t_ref, o + 3)
            # (x_c, y_c, w, h) -> corners.  The per-cell grid shift is common
            # to pred and target, so it cancels in the IoU and is omitted.
            pcx, pcy = px * inv_s, py * inv_s
            tcx, tcy = tx * inv_s, ty * inv_s
            px1, px2 = pcx - 0.5 * pw, pcx + 0.5 * pw
            py1, py2 = pcy - 0.5 * ph, pcy + 0.5 * ph
            tx1, tx2 = tcx - 0.5 * tw, tcx + 0.5 * tw
            ty1, ty2 = tcy - 0.5 * th, tcy + 0.5 * th
            iw = jnp.maximum(jnp.minimum(px2, tx2) - jnp.maximum(px1, tx1), 0.0)
            ih = jnp.maximum(jnp.minimum(py2, ty2) - jnp.maximum(py1, ty1), 0.0)
            inter = iw * ih
            area_p = (px2 - px1) * (py2 - py1)
            area_t = (tx2 - tx1) * (ty2 - ty1)
            return inter / (area_p + area_t - inter + EPS)

        iou0 = box_iou(0)
        iou1 = box_iou(1)
        # strict '>' keeps box 0 on ties (matches argmax / torch.max first idx)
        sel1 = (iou1 > iou0).astype(jnp.float32)
        sel0 = 1.0 - sel1
        best_iou = jnp.maximum(iou0, iou1)

        def sel(ref, k):                          # channel value of the best box
            return sel0 * ld(ref, k) + sel1 * ld(ref, 5 + k)

        dx = sel(p_ref, 0) - sel(t_ref, 0)
        dy = sel(p_ref, 1) - sel(t_ref, 1)
        dw = jnp.sqrt(sel(p_ref, 2)) - jnp.sqrt(sel(t_ref, 2))
        dh = jnp.sqrt(sel(p_ref, 3)) - jnp.sqrt(sel(t_ref, 3))
        loc = dx * dx + dy * dy + dw * dw + dh * dh

        sc_p = sel(p_ref, 4)
        obj_d = best_iou - sc_p
        obj = obj_d * obj_d
        pc0, pc1 = ld(p_ref, 4), ld(p_ref, 9)
        # sum_b (1 - is_max_b*is_obj) * pc_b^2  ==  pc0^2+pc1^2 - is_obj*pc_sel^2
        noobj = pc0 * pc0 + pc1 * pc1 - is_obj * (sc_p * sc_p)

        cls = jnp.zeros_like(is_obj)
        for c in range(C):
            d = ld(p_ref, 5 * B + c) - ld(t_ref, 5 * B + c)
            cls = cls + d * d

        per_lane = (LAMBDA_COORD * is_obj * loc
                    + is_obj * obj
                    + LAMBDA_NOOBJ * noobj
                    + is_obj * cls)
        return acc + per_lane

    acc0 = jnp.zeros((sub, lanes), jnp.float32)
    acc = lax.fori_loop(0, nc, chunk_loss, acc0)
    out_ref[0, 0] = jnp.sum(acc)                  # per-block partial sum


# ----------------------------- wrapper ----------------------------------------
@jax.jit
def yolo_loss_pallas(predictions, targets):
    N = predictions.shape[0]
    L = N * S * S
    cells_per_chunk = 8 * CW
    nc_total = pl.cdiv(L, cells_per_chunk)
    nc_blk = min(NC_PER_BLOCK, nc_total)
    nc_total = _round_up(nc_total, nc_blk)
    num_blocks = nc_total // nc_blk
    L_pad = nc_total * cells_per_chunk

    # Single relayout pass: (N,S,S,D) -> zero-padded (D, nc_total, 8, CW).
    # Zero padding is loss-neutral (is_object=0, conf=0, all terms vanish).
    def relayout(x):
        x = x.reshape(L, D)
        if L_pad > L:
            x = jnp.pad(x, ((0, L_pad - L), (0, 0)))
        return x.reshape(nc_total, 8, CW, D).transpose(3, 0, 1, 2)

    p4 = relayout(predictions)
    t4 = relayout(targets)

    partials = pl.pallas_call(
        _yolo_loss_kernel,
        out_shape=jax.ShapeDtypeStruct((num_blocks, 1), jnp.float32),
        grid=(num_blocks,),
        in_specs=[
            pl.BlockSpec((D, nc_blk, 8, CW), lambda i: (0, i, 0, 0)),
            pl.BlockSpec((D, nc_blk, 8, CW), lambda i: (0, i, 0, 0)),
        ],
        out_specs=pl.BlockSpec((1, 1), lambda i: (i, 0),
                               memory_space=pltpu.MemorySpace.SMEM),
        compiler_params=pltpu.CompilerParams(
            dimension_semantics=("parallel",),
        ),
    )(p4, t4)
    return jnp.sum(partials) / jnp.float32(N)


# ----------------------------- plain-JAX reference ---------------------------
def _convert_box_coords_ref(boxes):
    shifts = (jnp.arange(S, dtype=jnp.int32) * (1.0 / S)).astype(jnp.float32)
    shifts_y, shifts_x = jnp.meshgrid(shifts, shifts, indexing="ij")
    shifts_x = jnp.broadcast_to(shifts_x.reshape(1, S, S, 1), (1, S, S, B))
    shifts_y = jnp.broadcast_to(shifts_y.reshape(1, S, S, 1), (1, S, S, B))
    x1 = boxes[..., 0] / S + shifts_x - 0.5 * boxes[..., 2]
    y1 = boxes[..., 1] / S + shifts_y - 0.5 * boxes[..., 3]
    x2 = boxes[..., 0] / S + shifts_x + 0.5 * boxes[..., 2]
    y2 = boxes[..., 1] / S + shifts_y + 0.5 * boxes[..., 3]
    return jnp.stack([x1, y1, x2, y2], axis=-1)


def _get_iou_ref(b1, b2):
    ix1 = jnp.maximum(b1[..., 0], b2[..., 0])
    iy1 = jnp.maximum(b1[..., 1], b2[..., 1])
    ix2 = jnp.minimum(b1[..., 2], b2[..., 2])
    iy2 = jnp.minimum(b1[..., 3], b2[..., 3])
    inter = jnp.maximum(ix2 - ix1, 0.0) * jnp.maximum(iy2 - iy1, 0.0)
    a1 = (b1[..., 2] - b1[..., 0]) * (b1[..., 3] - b1[..., 1])
    a2 = (b2[..., 2] - b2[..., 0]) * (b2[..., 3] - b2[..., 1])
    return inter / (a1 + a2 - inter + EPS)


def yolo_loss_ref(predictions, targets):
    pred_boxes = predictions[..., : B * 5].reshape(-1, S, S, B, 5)
    pred_classes = predictions[..., B * 5:]
    tgt_boxes = targets[..., : B * 5].reshape(-1, S, S, B, 5)
    tgt_classes = targets[..., B * 5:]
    pred_conf = pred_boxes[..., -1]
    tgt_conf = tgt_boxes[..., -1]
    is_object = (tgt_conf > 0)[..., 0][..., None].astype(jnp.float32)

    iou = _get_iou_ref(_convert_box_coords_ref(pred_boxes[..., :-1]),
                       _convert_box_coords_ref(tgt_boxes[..., :-1]))
    max_idx = jnp.argmax(iou, axis=-1)[..., None]
    bb = jnp.arange(B).reshape(1, 1, 1, B)
    is_max = (max_idx == bb).astype(jnp.float32)
    m = is_max * is_object

    x_mse = jnp.sum(m * (pred_boxes[..., 0] - tgt_boxes[..., 0]) ** 2)
    y_mse = jnp.sum(m * (pred_boxes[..., 1] - tgt_boxes[..., 1]) ** 2)
    w_mse = jnp.sum(m * (pred_boxes[..., 2] ** 0.5 - tgt_boxes[..., 2] ** 0.5) ** 2)
    h_mse = jnp.sum(m * (pred_boxes[..., 3] ** 0.5 - tgt_boxes[..., 3] ** 0.5) ** 2)
    loc = LAMBDA_COORD * (x_mse + y_mse + w_mse + h_mse)
    obj = jnp.sum(m * (iou - pred_conf) ** 2)
    noobj = LAMBDA_NOOBJ * jnp.sum((1.0 - m) * pred_conf ** 2)
    cls = jnp.sum(is_object * (pred_classes - tgt_classes) ** 2)
    return (loc + obj + noobj + cls) / predictions.shape[0]


# ----------------------------- driver -----------------------------------------
if __name__ == "__main__":
    key = jax.random.PRNGKey(0)
    k1, k2 = jax.random.split(key)
    batch = 2
    # uniform [0,1) keeps w/h non-negative so sqrt() is well defined (as in YOLO)
    predictions = jax.random.uniform(k1, (batch, S, S, D), dtype=jnp.float32)
    targets = jax.random.uniform(k2, (batch, S, S, D), dtype=jnp.float32)

    loss = yolo_loss_pallas(predictions, targets)
    loss = jax.block_until_ready(loss)

    ref = yolo_loss_ref(predictions, targets)
    np.testing.assert_allclose(np.asarray(loss), np.asarray(ref),
                               rtol=1e-4, atol=1e-4)
    print("KERNEL_OK")
</pallas_src>

<mosaic_0001>
module attributes {stable_mosaic.version = 11 : i64} {
  func.func @_yolo_loss_kernel(%arg0: i32, %arg1: memref<30x1x8x256xf32, #tpu.memory_space<vmem>>, %arg2: memref<30x1x8x256xf32, #tpu.memory_space<vmem>>, %arg3: memref<1x1xf32, #tpu.memory_space<smem>>) attributes {dimension_semantics = [#tpu.dimension_semantics<parallel>], iteration_bounds = array<i64: 1>, scalar_prefetch = 0 : i64, scratch_operands = 0 : i64, tpu.core_type = #tpu.core_type<tc>, window_params = [{transform_indices = @transform_0, window_bounds = array<i64: 30, 1, 8, 256>}, {transform_indices = @transform_1, window_bounds = array<i64: 30, 1, 8, 256>}, {transform_indices = @transform_2, window_bounds = array<i64: 1, 1>}]} {
    %cst = arith.constant 0.000000e+00 : f32
    %0 = vector.broadcast %cst : f32 to vector<8x256xf32>
    %cst_0 = arith.constant 0.142857149 : f32
    %c0_i32 = arith.constant 0 : i32
    %c4 = arith.constant 4 : index
    %1 = arith.index_cast %c0_i32 : i32 to index
    %c0 = arith.constant 0 : index
    %c0_1 = arith.constant 0 : index
    %2 = vector.load %arg2[%c4, %1, %c0, %c0_1] : memref<30x1x8x256xf32, #tpu.memory_space<vmem>>, vector<1x1x8x256xf32>
    %3 = vector.shape_cast %2 : vector<1x1x8x256xf32> to vector<8x256xf32>
    %cst_2 = arith.constant 0.000000e+00 : f32
    %4 = vector.broadcast %cst_2 : f32 to vector<8x256xf32>
    %5 = arith.cmpf ogt, %3, %4 : vector<8x256xf32>
    %6 = arith.extui %5 : vector<8x256xi1> to vector<8x256xi32>
    %7 = arith.sitofp %6 : vector<8x256xi32> to vector<8x256xf32>
    %c0_3 = arith.constant 0 : index
    %8 = arith.index_cast %c0_i32 : i32 to index
    %c0_4 = arith.constant 0 : index
    %c0_5 = arith.constant 0 : index
    %9 = vector.load %arg1[%c0_3, %8, %c0_4, %c0_5] : memref<30x1x8x256xf32, #tpu.memory_space<vmem>>, vector<1x1x8x256xf32>
    %10 = vector.shape_cast %9 : vector<1x1x8x256xf32> to vector<8x256xf32>
    %c1 = arith.constant 1 : index
    %11 = arith.index_cast %c0_i32 : i32 to index
    %c0_6 = arith.constant 0 : index
    %c0_7 = arith.constant 0 : index
    %12 = vector.load %arg1[%c1, %11, %c0_6, %c0_7] : memref<30x1x8x256xf32, #tpu.memory_space<vmem>>, vector<1x1x8x256xf32>
    %13 = vector.shape_cast %12 : vector<1x1x8x256xf32> to vector<8x256xf32>
    %c2 = arith.constant 2 : index
    %14 = arith.index_cast %c0_i32 : i32 to index
    %c0_8 = arith.constant 0 : index
    %c0_9 = arith.constant 0 : index
    %15 = vector.load %arg1[%c2, %14, %c0_8, %c0_9] : memref<30x1x8x256xf32, #tpu.memory_space<vmem>>, vector<1x1x8x256xf32>
    %16 = vector.shape_cast %15 : vector<1x1x8x256xf32> to vector<8x256xf32>
    %c3 = arith.constant 3 : index
    %17 = arith.index_cast %c0_i32 : i32 to index
    %c0_10 = arith.constant 0 : index
    %c0_11 = arith.constant 0 : index
    %18 = vector.load %arg1[%c3, %17, %c0_10, %c0_11] : memref<30x1x8x256xf32, #tpu.memory_space<vmem>>, vector<1x1x8x256xf32>
    %19 = vector.shape_cast %18 : vector<1x1x8x256xf32> to vector<8x256xf32>
    %c0_12 = arith.constant 0 : index
    %20 = arith.index_cast %c0_i32 : i32 to index
    %c0_13 = arith.constant 0 : index
    %c0_14 = arith.constant 0 : index
    %21 = vector.load %arg2[%c0_12, %20, %c0_13, %c0_14] : memref<30x1x8x256xf32, #tpu.memory_space<vmem>>, vector<1x1x8x256xf32>
    %22 = vector.shape_cast %21 : vector<1x1x8x256xf32> to vector<8x256xf32>
    %c1_15 = arith.constant 1 : index
    %23 = arith.index_cast %c0_i32 : i32 to index
    %c0_16 = arith.constant 0 : index
    %c0_17 = arith.constant 0 : index
    %24 = vector.load %arg2[%c1_15, %23, %c0_16, %c0_17] : memref<30x1x8x256xf32, #tpu.memory_space<vmem>>, vector<1x1x8x256xf32>
    %25 = vector.shape_cast %24 : vector<1x1x8x256xf32> to vector<8x256xf32>
    %c2_18 = arith.constant 2 : index
    %26 = arith.index_cast %c0_i32 : i32 to index
    %c0_19 = arith.constant 0 : index
    %c0_20 = arith.constant 0 : index
    %27 = vector.load %arg2[%c2_18, %26, %c0_19, %c0_20] : memref<30x1x8x256xf32, #tpu.memory_space<vmem>>, vector<1x1x8x256xf32>
    %28 = vector.shape_cast %27 : vector<1x1x8x256xf32> to vector<8x256xf32>
    %c3_21 = arith.constant 3 : index
    %29 = arith.index_cast %c0_i32 : i32 to index
    %c0_22 = arith.constant 0 : index
    %c0_23 = arith.constant 0 : index
    %30 = vector.load %arg2[%c3_21, %29, %c0_22, %c0_23] : memref<30x1x8x256xf32, #tpu.memory_space<vmem>>, vector<1x1x8x256xf32>
    %31 = vector.shape_cast %30 : vector<1x1x8x256xf32> to vector<8x256xf32>
    %32 = vector.broadcast %cst_0 : f32 to vector<8x256xf32>
    %33 = arith.mulf %10, %32 : vector<8x256xf32>
    %34 = vector.broadcast %cst_0 : f32 to vector<8x256xf32>
    %35 = arith.mulf %13, %34 : vector<8x256xf32>
    %36 = vector.broadcast %cst_0 : f32 to vector<8x256xf32>
    %37 = arith.mulf %22, %36 : vector<8x256xf32>
    %38 = vector.broadcast %cst_0 : f32 to vector<8x256xf32>
    %39 = arith.mulf %25, %38 : vector<8x256xf32>
    %cst_24 = arith.constant 5.000000e-01 : f32
    %40 = vector.broadcast %cst_24 : f32 to vector<8x256xf32>
    %41 = arith.mulf %40, %16 : vector<8x256xf32>
    %42 = arith.subf %33, %41 : vector<8x256xf32>
    %cst_25 = arith.constant 5.000000e-01 : f32
    %43 = vector.broadcast %cst_25 : f32 to vector<8x256xf32>
    %44 = arith.mulf %43, %16 : vector<8x256xf32>
    %45 = arith.addf %33, %44 : vector<8x256xf32>
    %cst_26 = arith.constant 5.000000e-01 : f32
    %46 = vector.broadcast %cst_26 : f32 to vector<8x256xf32>
    %47 = arith.mulf %46, %19 : vector<8x256xf32>
    %48 = arith.subf %35, %47 : vector<8x256xf32>
    %cst_27 = arith.constant 5.000000e-01 : f32
    %49 = vector.broadcast %cst_27 : f32 to vector<8x256xf32>
    %50 = arith.mulf %49, %19 : vector<8x256xf32>
    %51 = arith.addf %35, %50 : vector<8x256xf32>
    %cst_28 = arith.constant 5.000000e-01 : f32
    %52 = vector.broadcast %cst_28 : f32 to vector<8x256xf32>
    %53 = arith.mulf %52, %28 : vector<8x256xf32>
    %54 = arith.subf %37, %53 : vector<8x256xf32>
    %cst_29 = arith.constant 5.000000e-01 : f32
    %55 = vector.broadcast %cst_29 : f32 to vector<8x256xf32>
    %56 = arith.mulf %55, %28 : vector<8x256xf32>
    %57 = arith.addf %37, %56 : vector<8x256xf32>
    %cst_30 = arith.constant 5.000000e-01 : f32
    %58 = vector.broadcast %cst_30 : f32 to vector<8x256xf32>
    %59 = arith.mulf %58, %31 : vector<8x256xf32>
    %60 = arith.subf %39, %59 : vector<8x256xf32>
    %cst_31 = arith.constant 5.000000e-01 : f32
    %61 = vector.broadcast %cst_31 : f32 to vector<8x256xf32>
    %62 = arith.mulf %61, %31 : vector<8x256xf32>
    %63 = arith.addf %39, %62 : vector<8x256xf32>
    %64 = arith.minimumf %45, %57 : vector<8x256xf32>
    %65 = arith.maximumf %42, %54 : vector<8x256xf32>
    %66 = arith.subf %64, %65 : vector<8x256xf32>
    %cst_32 = arith.constant 0.000000e+00 : f32
    %67 = vector.broadcast %cst_32 : f32 to vector<8x256xf32>
    %68 = arith.maximumf %66, %67 : vector<8x256xf32>
    %69 = arith.minimumf %51, %63 : vector<8x256xf32>
    %70 = arith.maximumf %48, %60 : vector<8x256xf32>
    %71 = arith.subf %69, %70 : vector<8x256xf32>
    %cst_33 = arith.constant 0.000000e+00 : f32
    %72 = vector.broadcast %cst_33 : f32 to vector<8x256xf32>
    %73 = arith.maximumf %71, %72 : vector<8x256xf32>
    %74 = arith.mulf %68, %73 : vector<8x256xf32>
    %75 = arith.subf %45, %42 : vector<8x256xf32>
    %76 = arith.subf %51, %48 : vector<8x256xf32>
    %77 = arith.mulf %75, %76 : vector<8x256xf32>
    %78 = arith.subf %57, %54 : vector<8x256xf32>
    %79 = arith.subf %63, %60 : vector<8x256xf32>
    %80 = arith.mulf %78, %79 : vector<8x256xf32>
    %81 = arith.addf %77, %80 : vector<8x256xf32>
    %82 = arith.subf %81, %74 : vector<8x256xf32>
    %cst_34 = arith.constant 9.99999997E-7 : f32
    %83 = vector.broadcast %cst_34 : f32 to vector<8x256xf32>
    %84 = arith.addf %82, %83 : vector<8x256xf32>
    %85 = arith.divf %74, %84 : vector<8x256xf32>
    %c5 = arith.constant 5 : index
    %86 = arith.index_cast %c0_i32 : i32 to index
    %c0_35 = arith.constant 0 : index
    %c0_36 = arith.constant 0 : index
    %87 = vector.load %arg1[%c5, %86, %c0_35, %c0_36] : memref<30x1x8x256xf32, #tpu.memory_space<vmem>>, vector<1x1x8x256xf32>
    %88 = vector.shape_cast %87 : vector<1x1x8x256xf32> to vector<8x256xf32>
    %c6 = arith.constant 6 : index
    %89 = arith.index_cast %c0_i32 : i32 to index
    %c0_37 = arith.constant 0 : index
    %c0_38 = arith.constant 0 : index
    %90 = vector.load %arg1[%c6, %89, %c0_37, %c0_38] : memref<30x1x8x256xf32, #tpu.memory_space<vmem>>, vector<1x1x8x256xf32>
    %91 = vector.shape_cast %90 : vector<1x1x8x256xf32> to vector<8x256xf32>
    %c7 = arith.constant 7 : index
    %92 = arith.index_cast %c0_i32 : i32 to index
    %c0_39 = arith.constant 0 : index
    %c0_40 = arith.constant 0 : index
    %93 = vector.load %arg1[%c7, %92, %c0_39, %c0_40] : memref<30x1x8x256xf32, #tpu.memory_space<vmem>>, vector<1x1x8x256xf32>
    %94 = vector.shape_cast %93 : vector<1x1x8x256xf32> to vector<8x256xf32>
    %c8 = arith.constant 8 : index
    %95 = arith.index_cast %c0_i32 : i32 to index
    %c0_41 = arith.constant 0 : index
    %c0_42 = arith.constant 0 : index
    %96 = vector.load %arg1[%c8, %95, %c0_41, %c0_42] : memref<30x1x8x256xf32, #tpu.memory_space<vmem>>, vector<1x1x8x256xf32>
    %97 = vector.shape_cast %96 : vector<1x1x8x256xf32> to vector<8x256xf32>
    %c5_43 = arith.constant 5 : index
    %98 = arith.index_cast %c0_i32 : i32 to index
    %c0_44 = arith.constant 0 : index
    %c0_45 = arith.constant 0 : index
    %99 = vector.load %arg2[%c5_43, %98, %c0_44, %c0_45] : memref<30x1x8x256xf32, #tpu.memory_space<vmem>>, vector<1x1x8x256xf32>
    %100 = vector.shape_cast %99 : vector<1x1x8x256xf32> to vector<8x256xf32>
    %c6_46 = arith.constant 6 : index
    %101 = arith.index_cast %c0_i32 : i32 to index
    %c0_47 = arith.constant 0 : index
    %c0_48 = arith.constant 0 : index
    %102 = vector.load %arg2[%c6_46, %101, %c0_47, %c0_48] : memref<30x1x8x256xf32, #tpu.memory_space<vmem>>, vector<1x1x8x256xf32>
    %103 = vector.shape_cast %102 : vector<1x1x8x256xf32> to vector<8x256xf32>
    %c7_49 = arith.constant 7 : index
    %104 = arith.index_cast %c0_i32 : i32 to index
    %c0_50 = arith.constant 0 : index
    %c0_51 = arith.constant 0 : index
    %105 = vector.load %arg2[%c7_49, %104, %c0_50, %c0_51] : memref<30x1x8x256xf32, #tpu.memory_space<vmem>>, vector<1x1x8x256xf32>
    %106 = vector.shape_cast %105 : vector<1x1x8x256xf32> to vector<8x256xf32>
    %c8_52 = arith.constant 8 : index
    %107 = arith.index_cast %c0_i32 : i32 to index
    %c0_53 = arith.constant 0 : index
    %c0_54 = arith.constant 0 : index
    %108 = vector.load %arg2[%c8_52, %107, %c0_53, %c0_54] : memref<30x1x8x256xf32, #tpu.memory_space<vmem>>, vector<1x1x8x256xf32>
    %109 = vector.shape_cast %108 : vector<1x1x8x256xf32> to vector<8x256xf32>
    %110 = vector.broadcast %cst_0 : f32 to vector<8x256xf32>
    %111 = arith.mulf %88, %110 : vector<8x256xf32>
    %112 = vector.broadcast %cst_0 : f32 to vector<8x256xf32>
    %113 = arith.mulf %91, %112 : vector<8x256xf32>
    %114 = vector.broadcast %cst_0 : f32 to vector<8x256xf32>
    %115 = arith.mulf %100, %114 : vector<8x256xf32>
    %116 = vector.broadcast %cst_0 : f32 to vector<8x256xf32>
    %117 = arith.mulf %103, %116 : vector<8x256xf32>
    %cst_55 = arith.constant 5.000000e-01 : f32
    %118 = vector.broadcast %cst_55 : f32 to vector<8x256xf32>
    %119 = arith.mulf %118, %94 : vector<8x256xf32>
    %120 = arith.subf %111, %119 : vector<8x256xf32>
    %cst_56 = arith.constant 5.000000e-01 : f32
    %121 = vector.broadcast %cst_56 : f32 to vector<8x256xf32>
    %122 = arith.mulf %121, %94 : vector<8x256xf32>
    %123 = arith.addf %111, %122 : vector<8x256xf32>
    %cst_57 = arith.constant 5.000000e-01 : f32
    %124 = vector.broadcast %cst_57 : f32 to vector<8x256xf32>
    %125 = arith.mulf %124, %97 : vector<8x256xf32>
    %126 = arith.subf %113, %125 : vector<8x256xf32>
    %cst_58 = arith.constant 5.000000e-01 : f32
    %127 = vector.broadcast %cst_58 : f32 to vector<8x256xf32>
    %128 = arith.mulf %127, %97 : vector<8x256xf32>
    %129 = arith.addf %113, %128 : vector<8x256xf32>
    %cst_59 = arith.constant 5.000000e-01 : f32
    %130 = vector.broadcast %cst_59 : f32 to vector<8x256xf32>
    %131 = arith.mulf %130, %106 : vector<8x256xf32>
    %132 = arith.subf %115, %131 : vector<8x256xf32>
    %cst_60 = arith.constant 5.000000e-01 : f32
    %133 = vector.broadcast %cst_60 : f32 to vector<8x256xf32>
    %134 = arith.mulf %133, %106 : vector<8x256xf32>
    %135 = arith.addf %115, %134 : vector<8x256xf32>
    %cst_61 = arith.constant 5.000000e-01 : f32
    %136 = vector.broadcast %cst_61 : f32 to vector<8x256xf32>
    %137 = arith.mulf %136, %109 : vector<8x256xf32>
    %138 = arith.subf %117, %137 : vector<8x256xf32>
    %cst_62 = arith.constant 5.000000e-01 : f32
    %139 = vector.broadcast %cst_62 : f32 to vector<8x256xf32>
    %140 = arith.mulf %139, %109 : vector<8x256xf32>
    %141 = arith.addf %117, %140 : vector<8x256xf32>
    %142 = arith.minimumf %123, %135 : vector<8x256xf32>
    %143 = arith.maximumf %120, %132 : vector<8x256xf32>
    %144 = arith.subf %142, %143 : vector<8x256xf32>
    %cst_63 = arith.constant 0.000000e+00 : f32
    %145 = vector.broadcast %cst_63 : f32 to vector<8x256xf32>
    %146 = arith.maximumf %144, %145 : vector<8x256xf32>
    %147 = arith.minimumf %129, %141 : vector<8x256xf32>
    %148 = arith.maximumf %126, %138 : vector<8x256xf32>
    %149 = arith.subf %147, %148 : vector<8x256xf32>
    %cst_64 = arith.constant 0.000000e+00 : f32
    %150 = vector.broadcast %cst_64 : f32 to vector<8x256xf32>
    %151 = arith.maximumf %149, %150 : vector<8x256xf32>
    %152 = arith.mulf %146, %151 : vector<8x256xf32>
    %153 = arith.subf %123, %120 : vector<8x256xf32>
    %154 = arith.subf %129, %126 : vector<8x256xf32>
    %155 = arith.mulf %153, %154 : vector<8x256xf32>
    %156 = arith.subf %135, %132 : vector<8x256xf32>
    %157 = arith.subf %141, %138 : vector<8x256xf32>
    %158 = arith.mulf %156, %157 : vector<8x256xf32>
    %159 = arith.addf %155, %158 : vector<8x256xf32>
    %160 = arith.subf %159, %152 : vector<8x256xf32>
    %cst_65 = arith.constant 9.99999997E-7 : f32
    %161 = vector.broadcast %cst_65 : f32 to vector<8x256xf32>
    %162 = arith.addf %160, %161 : vector<8x256xf32>
    %163 = arith.divf %152, %162 : vector<8x256xf32>
    %164 = arith.cmpf ogt, %163, %85 : vector<8x256xf32>
    %165 = arith.extui %164 : vector<8x256xi1> to vector<8x256xi32>
    %166 = arith.sitofp %165 : vector<8x256xi32> to vector<8x256xf32>
    %cst_66 = arith.constant 1.000000e+00 : f32
    %167 = vector.broadcast %cst_66 : f32 to vector<8x256xf32>
    %168 = arith.subf %167, %166 : vector<8x256xf32>
    %169 = arith.maximumf %85, %163 : vector<8x256xf32>
    %c0_67 = arith.constant 0 : index
    %170 = arith.index_cast %c0_i32 : i32 to index
    %c0_68 = arith.constant 0 : index
    %c0_69 = arith.constant 0 : index
    %171 = vector.load %arg1[%c0_67, %170, %c0_68, %c0_69] : memref<30x1x8x256xf32, #tpu.memory_space<vmem>>, vector<1x1x8x256xf32>
    %172 = vector.shape_cast %171 : vector<1x1x8x256xf32> to vector<8x256xf32>
    %173 = arith.mulf %168, %172 : vector<8x256xf32>
    %c5_70 = arith.constant 5 : index
    %174 = arith.index_cast %c0_i32 : i32 to index
    %c0_71 = arith.constant 0 : index
    %c0_72 = arith.constant 0 : index
    %175 = vector.load %arg1[%c5_70, %174, %c0_71, %c0_72] : memref<30x1x8x256xf32, #tpu.memory_space<vmem>>, vector<1x1x8x256xf32>
    %176 = vector.shape_cast %175 : vector<1x1x8x256xf32> to vector<8x256xf32>
    %177 = arith.mulf %166, %176 : vector<8x256xf32>
    %178 = arith.addf %173, %177 : vector<8x256xf32>
    %c0_73 = arith.constant 0 : index
    %179 = arith.index_cast %c0_i32 : i32 to index
    %c0_74 = arith.constant 0 : index
    %c0_75 = arith.constant 0 : index
    %180 = vector.load %arg2[%c0_73, %179, %c0_74, %c0_75] : memref<30x1x8x256xf32, #tpu.memory_space<vmem>>, vector<1x1x8x256xf32>
    %181 = vector.shape_cast %180 : vector<1x1x8x256xf32> to vector<8x256xf32>
    %182 = arith.mulf %168, %181 : vector<8x256xf32>
    %c5_76 = arith.constant 5 : index
    %183 = arith.index_cast %c0_i32 : i32 to index
    %c0_77 = arith.constant 0 : index
    %c0_78 = arith.constant 0 : index
    %184 = vector.load %arg2[%c5_76, %183, %c0_77, %c0_78] : memref<30x1x8x256xf32, #tpu.memory_space<vmem>>, vector<1x1x8x256xf32>
    %185 = vector.shape_cast %184 : vector<1x1x8x256xf32> to vector<8x256xf32>
    %186 = arith.mulf %166, %185 : vector<8x256xf32>
    %187 = arith.addf %182, %186 : vector<8x256xf32>
    %188 = arith.subf %178, %187 : vector<8x256xf32>
    %c1_79 = arith.constant 1 : index
    %189 = arith.index_cast %c0_i32 : i32 to index
    %c0_80 = arith.constant 0 : index
    %c0_81 = arith.constant 0 : index
    %190 = vector.load %arg1[%c1_79, %189, %c0_80, %c0_81] : memref<30x1x8x256xf32, #tpu.memory_space<vmem>>, vector<1x1x8x256xf32>
    %191 = vector.shape_cast %190 : vector<1x1x8x256xf32> to vector<8x256xf32>
    %192 = arith.mulf %168, %191 : vector<8x256xf32>
    %c6_82 = arith.constant 6 : index
    %193 = arith.index_cast %c0_i32 : i32 to index
    %c0_83 = arith.constant 0 : index
    %c0_84 = arith.constant 0 : index
    %194 = vector.load %arg1[%c6_82, %193, %c0_83, %c0_84] : memref<30x1x8x256xf32, #tpu.memory_space<vmem>>, vector<1x1x8x256xf32>
    %195 = vector.shape_cast %194 : vector<1x1x8x256xf32> to vector<8x256xf32>
    %196 = arith.mulf %166, %195 : vector<8x256xf32>
    %197 = arith.addf %192, %196 : vector<8x256xf32>
    %c1_85 = arith.constant 1 : index
    %198 = arith.index_cast %c0_i32 : i32 to index
    %c0_86 = arith.constant 0 : index
    %c0_87 = arith.constant 0 : index
    %199 = vector.load %arg2[%c1_85, %198, %c0_86, %c0_87] : memref<30x1x8x256xf32, #tpu.memory_space<vmem>>, vector<1x1x8x256xf32>
    %200 = vector.shape_cast %199 : vector<1x1x8x256xf32> to vector<8x256xf32>
    %201 = arith.mulf %168, %200 : vector<8x256xf32>
    %c6_88 = arith.constant 6 : index
    %202 = arith.index_cast %c0_i32 : i32 to index
    %c0_89 = arith.constant 0 : index
    %c0_90 = arith.constant 0 : index
    %203 = vector.load %arg2[%c6_88, %202, %c0_89, %c0_90] : memref<30x1x8x256xf32, #tpu.memory_space<vmem>>, vector<1x1x8x256xf32>
    %204 = vector.shape_cast %203 : vector<1x1x8x256xf32> to vector<8x256xf32>
    %205 = arith.mulf %166, %204 : vector<8x256xf32>
    %206 = arith.addf %201, %205 : vector<8x256xf32>
    %207 = arith.subf %197, %206 : vector<8x256xf32>
    %c2_91 = arith.constant 2 : index
    %208 = arith.index_cast %c0_i32 : i32 to index
    %c0_92 = arith.constant 0 : index
    %c0_93 = arith.constant 0 : index
    %209 = vector.load %arg1[%c2_91, %208, %c0_92, %c0_93] : memref<30x1x8x256xf32, #tpu.memory_space<vmem>>, vector<1x1x8x256xf32>
    %210 = vector.shape_cast %209 : vector<1x1x8x256xf32> to vector<8x256xf32>
    %211 = arith.mulf %168, %210 : vector<8x256xf32>
    %c7_94 = arith.constant 7 : index
    %212 = arith.index_cast %c0_i32 : i32 to index
    %c0_95 = arith.constant 0 : index
    %c0_96 = arith.constant 0 : index
    %213 = vector.load %arg1[%c7_94, %212, %c0_95, %c0_96] : memref<30x1x8x256xf32, #tpu.memory_space<vmem>>, vector<1x1x8x256xf32>
    %214 = vector.shape_cast %213 : vector<1x1x8x256xf32> to vector<8x256xf32>
    %215 = arith.mulf %166, %214 : vector<8x256xf32>
    %216 = arith.addf %211, %215 : vector<8x256xf32>
    %217 = math.sqrt %216 : vector<8x256xf32>
    %c2_97 = arith.constant 2 : index
    %218 = arith.index_cast %c0_i32 : i32 to index
    %c0_98 = arith.constant 0 : index
    %c0_99 = arith.constant 0 : index
    %219 = vector.load %arg2[%c2_97, %218, %c0_98, %c0_99] : memref<30x1x8x256xf32, #tpu.memory_space<vmem>>, vector<1x1x8x256xf32>
    %220 = vector.shape_cast %219 : vector<1x1x8x256xf32> to vector<8x256xf32>
    %221 = arith.mulf %168, %220 : vector<8x256xf32>
    %c7_100 = arith.constant 7 : index
    %222 = arith.index_cast %c0_i32 : i32 to index
    %c0_101 = arith.constant 0 : index
    %c0_102 = arith.constant 0 : index
    %223 = vector.load %arg2[%c7_100, %222, %c0_101, %c0_102] : memref<30x1x8x256xf32, #tpu.memory_space<vmem>>, vector<1x1x8x256xf32>
    %224 = vector.shape_cast %223 : vector<1x1x8x256xf32> to vector<8x256xf32>
    %225 = arith.mulf %166, %224 : vector<8x256xf32>
    %226 = arith.addf %221, %225 : vector<8x256xf32>
    %227 = math.sqrt %226 : vector<8x256xf32>
    %228 = arith.subf %217, %227 : vector<8x256xf32>
    %c3_103 = arith.constant 3 : index
    %229 = arith.index_cast %c0_i32 : i32 to index
    %c0_104 = arith.constant 0 : index
    %c0_105 = arith.constant 0 : index
    %230 = vector.load %arg1[%c3_103, %229, %c0_104, %c0_105] : memref<30x1x8x256xf32, #tpu.memory_space<vmem>>, vector<1x1x8x256xf32>
    %231 = vector.shape_cast %230 : vector<1x1x8x256xf32> to vector<8x256xf32>
    %232 = arith.mulf %168, %231 : vector<8x256xf32>
    %c8_106 = arith.constant 8 : index
    %233 = arith.index_cast %c0_i32 : i32 to index
    %c0_107 = arith.constant 0 : index
    %c0_108 = arith.constant 0 : index
    %234 = vector.load %arg1[%c8_106, %233, %c0_107, %c0_108] : memref<30x1x8x256xf32, #tpu.memory_space<vmem>>, vector<1x1x8x256xf32>
    %235 = vector.shape_cast %234 : vector<1x1x8x256xf32> to vector<8x256xf32>
    %236 = arith.mulf %166, %235 : vector<8x256xf32>
    %237 = arith.addf %232, %236 : vector<8x256xf32>
    %238 = math.sqrt %237 : vector<8x256xf32>
    %c3_109 = arith.constant 3 : index
    %239 = arith.index_cast %c0_i32 : i32 to index
    %c0_110 = arith.constant 0 : index
    %c0_111 = arith.constant 0 : index
    %240 = vector.load %arg2[%c3_109, %239, %c0_110, %c0_111] : memref<30x1x8x256xf32, #tpu.memory_space<vmem>>, vector<1x1x8x256xf32>
    %241 = vector.shape_cast %240 : vector<1x1x8x256xf32> to vector<8x256xf32>
    %242 = arith.mulf %168, %241 : vector<8x256xf32>
    %c8_112 = arith.constant 8 : index
    %243 = arith.index_cast %c0_i32 : i32 to index
    %c0_113 = arith.constant 0 : index
    %c0_114 = arith.constant 0 : index
    %244 = vector.load %arg2[%c8_112, %243, %c0_113, %c0_114] : memref<30x1x8x256xf32, #tpu.memory_space<vmem>>, vector<1x1x8x256xf32>
    %245 = vector.shape_cast %244 : vector<1x1x8x256xf32> to vector<8x256xf32>
    %246 = arith.mulf %166, %245 : vector<8x256xf32>
    %247 = arith.addf %242, %246 : vector<8x256xf32>
    %248 = math.sqrt %247 : vector<8x256xf32>
    %249 = arith.subf %238, %248 : vector<8x256xf32>
    %250 = arith.mulf %188, %188 : vector<8x256xf32>
    %251 = arith.mulf %207, %207 : vector<8x256xf32>
    %252 = arith.addf %250, %251 : vector<8x256xf32>
    %253 = arith.mulf %228, %228 : vector<8x256xf32>
    %254 = arith.addf %252, %253 : vector<8x256xf32>
    %255 = arith.mulf %249, %249 : vector<8x256xf32>
    %256 = arith.addf %254, %255 : vector<8x256xf32>
    %c4_115 = arith.constant 4 : index
    %257 = arith.index_cast %c0_i32 : i32 to index
    %c0_116 = arith.constant 0 : index
    %c0_117 = arith.constant 0 : index
    %258 = vector.load %arg1[%c4_115, %257, %c0_116, %c0_117] : memref<30x1x8x256xf32, #tpu.memory_space<vmem>>, vector<1x1x8x256xf32>
    %259 = vector.shape_cast %258 : vector<1x1x8x256xf32> to vector<8x256xf32>
    %260 = arith.mulf %168, %259 : vector<8x256xf32>
    %c9 = arith.constant 9 : index
    %261 = arith.index_cast %c0_i32 : i32 to index
    %c0_118 = arith.constant 0 : index
    %c0_119 = arith.constant 0 : index
    %262 = vector.load %arg1[%c9, %261, %c0_118, %c0_119] : memref<30x1x8x256xf32, #tpu.memory_space<vmem>>, vector<1x1x8x256xf32>
    %263 = vector.shape_cast %262 : vector<1x1x8x256xf32> to vector<8x256xf32>
    %264 = arith.mulf %166, %263 : vector<8x256xf32>
    %265 = arith.addf %260, %264 : vector<8x256xf32>
    %266 = arith.subf %169, %265 : vector<8x256xf32>
    %267 = arith.mulf %266, %266 : vector<8x256xf32>
    %c4_120 = arith.constant 4 : index
    %268 = arith.index_cast %c0_i32 : i32 to index
    %c0_121 = arith.constant 0 : index
    %c0_122 = arith.constant 0 : index
    %269 = vector.load %arg1[%c4_120, %268, %c0_121, %c0_122] : memref<30x1x8x256xf32, #tpu.memory_space<vmem>>, vector<1x1x8x256xf32>
    %270 = vector.shape_cast %269 : vector<1x1x8x256xf32> to vector<8x256xf32>
    %c9_123 = arith.constant 9 : index
    %271 = arith.index_cast %c0_i32 : i32 to index
    %c0_124 = arith.constant 0 : index
    %c0_125 = arith.constant 0 : index
    %272 = vector.load %arg1[%c9_123, %271, %c0_124, %c0_125] : memref<30x1x8x256xf32, #tpu.memory_space<vmem>>, vector<1x1x8x256xf32>
    %273 = vector.shape_cast %272 : vector<1x1x8x256xf32> to vector<8x256xf32>
    %274 = arith.mulf %270, %270 : vector<8x256xf32>
    %275 = arith.mulf %273, %273 : vector<8x256xf32>
    %276 = arith.addf %274, %275 : vector<8x256xf32>
    %277 = arith.mulf %265, %265 : vector<8x256xf32>
    %278 = arith.mulf %7, %277 : vector<8x256xf32>
    %279 = arith.subf %276, %278 : vector<8x256xf32>
    %cst_126 = arith.constant 0.000000e+00 : f32
    %280 = vector.broadcast %cst_126 : f32 to vector<8x256xf32>
    %c10 = arith.constant 10 : index
    %281 = arith.index_cast %c0_i32 : i32 to index
    %c0_127 = arith.constant 0 : index
    %c0_128 = arith.constant 0 : index
    %282 = vector.load %arg1[%c10, %281, %c0_127, %c0_128] : memref<30x1x8x256xf32, #tpu.memory_space<vmem>>, vector<1x1x8x256xf32>
    %283 = vector.shape_cast %282 : vector<1x1x8x256xf32> to vector<8x256xf32>
    %c10_129 = arith.constant 10 : index
    %284 = arith.index_cast %c0_i32 : i32 to index
    %c0_130 = arith.constant 0 : index
    %c0_131 = arith.constant 0 : index
    %285 = vector.load %arg2[%c10_129, %284, %c0_130, %c0_131] : memref<30x1x8x256xf32, #tpu.memory_space<vmem>>, vector<1x1x8x256xf32>
    %286 = vector.shape_cast %285 : vector<1x1x8x256xf32> to vector<8x256xf32>
    %287 = arith.subf %283, %286 : vector<8x256xf32>
    %288 = arith.mulf %287, %287 : vector<8x256xf32>
    %289 = arith.addf %280, %288 : vector<8x256xf32>
    %c11 = arith.constant 11 : index
    %290 = arith.index_cast %c0_i32 : i32 to index
    %c0_132 = arith.constant 0 : index
    %c0_133 = arith.constant 0 : index
    %291 = vector.load %arg1[%c11, %290, %c0_132, %c0_133] : memref<30x1x8x256xf32, #tpu.memory_space<vmem>>, vector<1x1x8x256xf32>
    %292 = vector.shape_cast %291 : vector<1x1x8x256xf32> to vector<8x256xf32>
    %c11_134 = arith.constant 11 : index
    %293 = arith.index_cast %c0_i32 : i32 to index
    %c0_135 = arith.constant 0 : index
    %c0_136 = arith.constant 0 : index
    %294 = vector.load %arg2[%c11_134, %293, %c0_135, %c0_136] : memref<30x1x8x256xf32, #tpu.memory_space<vmem>>, vector<1x1x8x256xf32>
    %295 = vector.shape_cast %294 : vector<1x1x8x256xf32> to vector<8x256xf32>
    %296 = arith.subf %292, %295 : vector<8x256xf32>
    %297 = arith.mulf %296, %296 : vector<8x256xf32>
    %298 = arith.addf %289, %297 : vector<8x256xf32>
    %c12 = arith.constant 12 : index
    %299 = arith.index_cast %c0_i32 : i32 to index
    %c0_137 = arith.constant 0 : index
    %c0_138 = arith.constant 0 : index
    %300 = vector.load %arg1[%c12, %299, %c0_137, %c0_138] : memref<30x1x8x256xf32, #tpu.memory_space<vmem>>, vector<1x1x8x256xf32>
    %301 = vector.shape_cast %300 : vector<1x1x8x256xf32> to vector<8x256xf32>
    %c12_139 = arith.constant 12 : index
    %302 = arith.index_cast %c0_i32 : i32 to index
    %c0_140 = arith.constant 0 : index
    %c0_141 = arith.constant 0 : index
    %303 = vector.load %arg2[%c12_139, %302, %c0_140, %c0_141] : memref<30x1x8x256xf32, #tpu.memory_space<vmem>>, vector<1x1x8x256xf32>
    %304 = vector.shape_cast %303 : vector<1x1x8x256xf32> to vector<8x256xf32>
    %305 = arith.subf %301, %304 : vector<8x256xf32>
    %306 = arith.mulf %305, %305 : vector<8x256xf32>
    %307 = arith.addf %298, %306 : vector<8x256xf32>
    %c13 = arith.constant 13 : index
    %308 = arith.index_cast %c0_i32 : i32 to index
    %c0_142 = arith.constant 0 : index
    %c0_143 = arith.constant 0 : index
    %309 = vector.load %arg1[%c13, %308, %c0_142, %c0_143] : memref<30x1x8x256xf32, #tpu.memory_space<vmem>>, vector<1x1x8x256xf32>
    %310 = vector.shape_cast %309 : vector<1x1x8x256xf32> to vector<8x256xf32>
    %c13_144 = arith.constant 13 : index
    %311 = arith.index_cast %c0_i32 : i32 to index
    %c0_145 = arith.constant 0 : index
    %c0_146 = arith.constant 0 : index
    %312 = vector.load %arg2[%c13_144, %311, %c0_145, %c0_146] : memref<30x1x8x256xf32, #tpu.memory_space<vmem>>, vector<1x1x8x256xf32>
    %313 = vector.shape_cast %312 : vector<1x1x8x256xf32> to vector<8x256xf32>
    %314 = arith.subf %310, %313 : vector<8x256xf32>
    %315 = arith.mulf %314, %314 : vector<8x256xf32>
    %316 = arith.addf %307, %315 : vector<8x256xf32>
    %c14 = arith.constant 14 : index
    %317 = arith.index_cast %c0_i32 : i32 to index
    %c0_147 = arith.constant 0 : index
    %c0_148 = arith.constant 0 : index
    %318 = vector.load %arg1[%c14, %317, %c0_147, %c0_148] : memref<30x1x8x256xf32, #tpu.memory_space<vmem>>, vector<1x1x8x256xf32>
    %319 = vector.shape_cast %318 : vector<1x1x8x256xf32> to vector<8x256xf32>
    %c14_149 = arith.constant 14 : index
    %320 = arith.index_cast %c0_i32 : i32 to index
    %c0_150 = arith.constant 0 : index
    %c0_151 = arith.constant 0 : index
    %321 = vector.load %arg2[%c14_149, %320, %c0_150, %c0_151] : memref<30x1x8x256xf32, #tpu.memory_space<vmem>>, vector<1x1x8x256xf32>
    %322 = vector.shape_cast %321 : vector<1x1x8x256xf32> to vector<8x256xf32>
    %323 = arith.subf %319, %322 : vector<8x256xf32>
    %324 = arith.mulf %323, %323 : vector<8x256xf32>
    %325 = arith.addf %316, %324 : vector<8x256xf32>
    %c15 = arith.constant 15 : index
    %326 = arith.index_cast %c0_i32 : i32 to index
    %c0_152 = arith.constant 0 : index
    %c0_153 = arith.constant 0 : index
    %327 = vector.load %arg1[%c15, %326, %c0_152, %c0_153] : memref<30x1x8x256xf32, #tpu.memory_space<vmem>>, vector<1x1x8x256xf32>
    %328 = vector.shape_cast %327 : vector<1x1x8x256xf32> to vector<8x256xf32>
    %c15_154 = arith.constant 15 : index
    %329 = arith.index_cast %c0_i32 : i32 to index
    %c0_155 = arith.constant 0 : index
    %c0_156 = arith.constant 0 : index
    %330 = vector.load %arg2[%c15_154, %329, %c0_155, %c0_156] : memref<30x1x8x256xf32, #tpu.memory_space<vmem>>, vector<1x1x8x256xf32>
    %331 = vector.shape_cast %330 : vector<1x1x8x256xf32> to vector<8x256xf32>
    %332 = arith.subf %328, %331 : vector<8x256xf32>
    %333 = arith.mulf %332, %332 : vector<8x256xf32>
    %334 = arith.addf %325, %333 : vector<8x256xf32>
    %c16 = arith.constant 16 : index
    %335 = arith.index_cast %c0_i32 : i32 to index
    %c0_157 = arith.constant 0 : index
    %c0_158 = arith.constant 0 : index
    %336 = vector.load %arg1[%c16, %335, %c0_157, %c0_158] : memref<30x1x8x256xf32, #tpu.memory_space<vmem>>, vector<1x1x8x256xf32>
    %337 = vector.shape_cast %336 : vector<1x1x8x256xf32> to vector<8x256xf32>
    %c16_159 = arith.constant 16 : index
    %338 = arith.index_cast %c0_i32 : i32 to index
    %c0_160 = arith.constant 0 : index
    %c0_161 = arith.constant 0 : index
    %339 = vector.load %arg2[%c16_159, %338, %c0_160, %c0_161] : memref<30x1x8x256xf32, #tpu.memory_space<vmem>>, vector<1x1x8x256xf32>
    %340 = vector.shape_cast %339 : vector<1x1x8x256xf32> to vector<8x256xf32>
    %341 = arith.subf %337, %340 : vector<8x256xf32>
    %342 = arith.mulf %341, %341 : vector<8x256xf32>
    %343 = arith.addf %334, %342 : vector<8x256xf32>
    %c17 = arith.constant 17 : index
    %344 = arith.index_cast %c0_i32 : i32 to index
    %c0_162 = arith.constant 0 : index
    %c0_163 = arith.constant 0 : index
    %345 = vector.load %arg1[%c17, %344, %c0_162, %c0_163] : memref<30x1x8x256xf32, #tpu.memory_space<vmem>>, vector<1x1x8x256xf32>
    %346 = vector.shape_cast %345 : vector<1x1x8x256xf32> to vector<8x256xf32>
    %c17_164 = arith.constant 17 : index
    %347 = arith.index_cast %c0_i32 : i32 to index
    %c0_165 = arith.constant 0 : index
    %c0_166 = arith.constant 0 : index
    %348 = vector.load %arg2[%c17_164, %347, %c0_165, %c0_166] : memref<30x1x8x256xf32, #tpu.memory_space<vmem>>, vector<1x1x8x256xf32>
    %349 = vector.shape_cast %348 : vector<1x1x8x256xf32> to vector<8x256xf32>
    %350 = arith.subf %346, %349 : vector<8x256xf32>
    %351 = arith.mulf %350, %350 : vector<8x256xf32>
    %352 = arith.addf %343, %351 : vector<8x256xf32>
    %c18 = arith.constant 18 : index
    %353 = arith.index_cast %c0_i32 : i32 to index
    %c0_167 = arith.constant 0 : index
    %c0_168 = arith.constant 0 : index
    %354 = vector.load %arg1[%c18, %353, %c0_167, %c0_168] : memref<30x1x8x256xf32, #tpu.memory_space<vmem>>, vector<1x1x8x256xf32>
    %355 = vector.shape_cast %354 : vector<1x1x8x256xf32> to vector<8x256xf32>
    %c18_169 = arith.constant 18 : index
    %356 = arith.index_cast %c0_i32 : i32 to index
    %c0_170 = arith.constant 0 : index
    %c0_171 = arith.constant 0 : index
    %357 = vector.load %arg2[%c18_169, %356, %c0_170, %c0_171] : memref<30x1x8x256xf32, #tpu.memory_space<vmem>>, vector<1x1x8x256xf32>
    %358 = vector.shape_cast %357 : vector<1x1x8x256xf32> to vector<8x256xf32>
    %359 = arith.subf %355, %358 : vector<8x256xf32>
    %360 = arith.mulf %359, %359 : vector<8x256xf32>
    %361 = arith.addf %352, %360 : vector<8x256xf32>
    %c19 = arith.constant 19 : index
    %362 = arith.index_cast %c0_i32 : i32 to index
    %c0_172 = arith.constant 0 : index
    %c0_173 = arith.constant 0 : index
    %363 = vector.load %arg1[%c19, %362, %c0_172, %c0_173] : memref<30x1x8x256xf32, #tpu.memory_space<vmem>>, vector<1x1x8x256xf32>
    %364 = vector.shape_cast %363 : vector<1x1x8x256xf32> to vector<8x256xf32>
    %c19_174 = arith.constant 19 : index
    %365 = arith.index_cast %c0_i32 : i32 to index
    %c0_175 = arith.constant 0 : index
    %c0_176 = arith.constant 0 : index
    %366 = vector.load %arg2[%c19_174, %365, %c0_175, %c0_176] : memref<30x1x8x256xf32, #tpu.memory_space<vmem>>, vector<1x1x8x256xf32>
    %367 = vector.shape_cast %366 : vector<1x1x8x256xf32> to vector<8x256xf32>
    %368 = arith.subf %364, %367 : vector<8x256xf32>
    %369 = arith.mulf %368, %368 : vector<8x256xf32>
    %370 = arith.addf %361, %369 : vector<8x256xf32>
    %c20 = arith.constant 20 : index
    %371 = arith.index_cast %c0_i32 : i32 to index
    %c0_177 = arith.constant 0 : index
    %c0_178 = arith.constant 0 : index
    %372 = vector.load %arg1[%c20, %371, %c0_177, %c0_178] : memref<30x1x8x256xf32, #tpu.memory_space<vmem>>, vector<1x1x8x256xf32>
    %373 = vector.shape_cast %372 : vector<1x1x8x256xf32> to vector<8x256xf32>
    %c20_179 = arith.constant 20 : index
    %374 = arith.index_cast %c0_i32 : i32 to index
    %c0_180 = arith.constant 0 : index
    %c0_181 = arith.constant 0 : index
    %375 = vector.load %arg2[%c20_179, %374, %c0_180, %c0_181] : memref<30x1x8x256xf32, #tpu.memory_space<vmem>>, vector<1x1x8x256xf32>
    %376 = vector.shape_cast %375 : vector<1x1x8x256xf32> to vector<8x256xf32>
    %377 = arith.subf %373, %376 : vector<8x256xf32>
    %378 = arith.mulf %377, %377 : vector<8x256xf32>
    %379 = arith.addf %370, %378 : vector<8x256xf32>
    %c21 = arith.constant 21 : index
    %380 = arith.index_cast %c0_i32 : i32 to index
    %c0_182 = arith.constant 0 : index
    %c0_183 = arith.constant 0 : index
    %381 = vector.load %arg1[%c21, %380, %c0_182, %c0_183] : memref<30x1x8x256xf32, #tpu.memory_space<vmem>>, vector<1x1x8x256xf32>
    %382 = vector.shape_cast %381 : vector<1x1x8x256xf32> to vector<8x256xf32>
    %c21_184 = arith.constant 21 : index
    %383 = arith.index_cast %c0_i32 : i32 to index
    %c0_185 = arith.constant 0 : index
    %c0_186 = arith.constant 0 : index
    %384 = vector.load %arg2[%c21_184, %383, %c0_185, %c0_186] : memref<30x1x8x256xf32, #tpu.memory_space<vmem>>, vector<1x1x8x256xf32>
    %385 = vector.shape_cast %384 : vector<1x1x8x256xf32> to vector<8x256xf32>
    %386 = arith.subf %382, %385 : vector<8x256xf32>
    %387 = arith.mulf %386, %386 : vector<8x256xf32>
    %388 = arith.addf %379, %387 : vector<8x256xf32>
    %c22 = arith.constant 22 : index
    %389 = arith.index_cast %c0_i32 : i32 to index
    %c0_187 = arith.constant 0 : index
    %c0_188 = arith.constant 0 : index
    %390 = vector.load %arg1[%c22, %389, %c0_187, %c0_188] : memref<30x1x8x256xf32, #tpu.memory_space<vmem>>, vector<1x1x8x256xf32>
    %391 = vector.shape_cast %390 : vector<1x1x8x256xf32> to vector<8x256xf32>
    %c22_189 = arith.constant 22 : index
    %392 = arith.index_cast %c0_i32 : i32 to index
    %c0_190 = arith.constant 0 : index
    %c0_191 = arith.constant 0 : index
    %393 = vector.load %arg2[%c22_189, %392, %c0_190, %c0_191] : memref<30x1x8x256xf32, #tpu.memory_space<vmem>>, vector<1x1x8x256xf32>
    %394 = vector.shape_cast %393 : vector<1x1x8x256xf32> to vector<8x256xf32>
    %395 = arith.subf %391, %394 : vector<8x256xf32>
    %396 = arith.mulf %395, %395 : vector<8x256xf32>
    %397 = arith.addf %388, %396 : vector<8x256xf32>
    %c23 = arith.constant 23 : index
    %398 = arith.index_cast %c0_i32 : i32 to index
    %c0_192 = arith.constant 0 : index
    %c0_193 = arith.constant 0 : index
    %399 = vector.load %arg1[%c23, %398, %c0_192, %c0_193] : memref<30x1x8x256xf32, #tpu.memory_space<vmem>>, vector<1x1x8x256xf32>
    %400 = vector.shape_cast %399 : vector<1x1x8x256xf32> to vector<8x256xf32>
    %c23_194 = arith.constant 23 : index
    %401 = arith.index_cast %c0_i32 : i32 to index
    %c0_195 = arith.constant 0 : index
    %c0_196 = arith.constant 0 : index
    %402 = vector.load %arg2[%c23_194, %401, %c0_195, %c0_196] : memref<30x1x8x256xf32, #tpu.memory_space<vmem>>, vector<1x1x8x256xf32>
    %403 = vector.shape_cast %402 : vector<1x1x8x256xf32> to vector<8x256xf32>
    %404 = arith.subf %400, %403 : vector<8x256xf32>
    %405 = arith.mulf %404, %404 : vector<8x256xf32>
    %406 = arith.addf %397, %405 : vector<8x256xf32>
    %c24 = arith.constant 24 : index
    %407 = arith.index_cast %c0_i32 : i32 to index
    %c0_197 = arith.constant 0 : index
    %c0_198 = arith.constant 0 : index
    %408 = vector.load %arg1[%c24, %407, %c0_197, %c0_198] : memref<30x1x8x256xf32, #tpu.memory_space<vmem>>, vector<1x1x8x256xf32>
    %409 = vector.shape_cast %408 : vector<1x1x8x256xf32> to vector<8x256xf32>
    %c24_199 = arith.constant 24 : index
    %410 = arith.index_cast %c0_i32 : i32 to index
    %c0_200 = arith.constant 0 : index
    %c0_201 = arith.constant 0 : index
    %411 = vector.load %arg2[%c24_199, %410, %c0_200, %c0_201] : memref<30x1x8x256xf32, #tpu.memory_space<vmem>>, vector<1x1x8x256xf32>
    %412 = vector.shape_cast %411 : vector<1x1x8x256xf32> to vector<8x256xf32>
    %413 = arith.subf %409, %412 : vector<8x256xf32>
    %414 = arith.mulf %413, %413 : vector<8x256xf32>
    %415 = arith.addf %406, %414 : vector<8x256xf32>
    %c25 = arith.constant 25 : index
    %416 = arith.index_cast %c0_i32 : i32 to index
    %c0_202 = arith.constant 0 : index
    %c0_203 = arith.constant 0 : index
    %417 = vector.load %arg1[%c25, %416, %c0_202, %c0_203] : memref<30x1x8x256xf32, #tpu.memory_space<vmem>>, vector<1x1x8x256xf32>
    %418 = vector.shape_cast %417 : vector<1x1x8x256xf32> to vector<8x256xf32>
    %c25_204 = arith.constant 25 : index
    %419 = arith.index_cast %c0_i32 : i32 to index
    %c0_205 = arith.constant 0 : index
    %c0_206 = arith.constant 0 : index
    %420 = vector.load %arg2[%c25_204, %419, %c0_205, %c0_206] : memref<30x1x8x256xf32, #tpu.memory_space<vmem>>, vector<1x1x8x256xf32>
    %421 = vector.shape_cast %420 : vector<1x1x8x256xf32> to vector<8x256xf32>
    %422 = arith.subf %418, %421 : vector<8x256xf32>
    %423 = arith.mulf %422, %422 : vector<8x256xf32>
    %424 = arith.addf %415, %423 : vector<8x256xf32>
    %c26 = arith.constant 26 : index
    %425 = arith.index_cast %c0_i32 : i32 to index
    %c0_207 = arith.constant 0 : index
    %c0_208 = arith.constant 0 : index
    %426 = vector.load %arg1[%c26, %425, %c0_207, %c0_208] : memref<30x1x8x256xf32, #tpu.memory_space<vmem>>, vector<1x1x8x256xf32>
    %427 = vector.shape_cast %426 : vector<1x1x8x256xf32> to vector<8x256xf32>
    %c26_209 = arith.constant 26 : index
    %428 = arith.index_cast %c0_i32 : i32 to index
    %c0_210 = arith.constant 0 : index
    %c0_211 = arith.constant 0 : index
    %429 = vector.load %arg2[%c26_209, %428, %c0_210, %c0_211] : memref<30x1x8x256xf32, #tpu.memory_space<vmem>>, vector<1x1x8x256xf32>
    %430 = vector.shape_cast %429 : vector<1x1x8x256xf32> to vector<8x256xf32>
    %431 = arith.subf %427, %430 : vector<8x256xf32>
    %432 = arith.mulf %431, %431 : vector<8x256xf32>
    %433 = arith.addf %424, %432 : vector<8x256xf32>
    %c27 = arith.constant 27 : index
    %434 = arith.index_cast %c0_i32 : i32 to index
    %c0_212 = arith.constant 0 : index
    %c0_213 = arith.constant 0 : index
    %435 = vector.load %arg1[%c27, %434, %c0_212, %c0_213] : memref<30x1x8x256xf32, #tpu.memory_space<vmem>>, vector<1x1x8x256xf32>
    %436 = vector.shape_cast %435 : vector<1x1x8x256xf32> to vector<8x256xf32>
    %c27_214 = arith.constant 27 : index
    %437 = arith.index_cast %c0_i32 : i32 to index
    %c0_215 = arith.constant 0 : index
    %c0_216 = arith.constant 0 : index
    %438 = vector.load %arg2[%c27_214, %437, %c0_215, %c0_216] : memref<30x1x8x256xf32, #tpu.memory_space<vmem>>, vector<1x1x8x256xf32>
    %439 = vector.shape_cast %438 : vector<1x1x8x256xf32> to vector<8x256xf32>
    %440 = arith.subf %436, %439 : vector<8x256xf32>
    %441 = arith.mulf %440, %440 : vector<8x256xf32>
    %442 = arith.addf %433, %441 : vector<8x256xf32>
    %c28 = arith.constant 28 : index
    %443 = arith.index_cast %c0_i32 : i32 to index
    %c0_217 = arith.constant 0 : index
    %c0_218 = arith.constant 0 : index
    %444 = vector.load %arg1[%c28, %443, %c0_217, %c0_218] : memref<30x1x8x256xf32, #tpu.memory_space<vmem>>, vector<1x1x8x256xf32>
    %445 = vector.shape_cast %444 : vector<1x1x8x256xf32> to vector<8x256xf32>
    %c28_219 = arith.constant 28 : index
    %446 = arith.index_cast %c0_i32 : i32 to index
    %c0_220 = arith.constant 0 : index
    %c0_221 = arith.constant 0 : index
    %447 = vector.load %arg2[%c28_219, %446, %c0_220, %c0_221] : memref<30x1x8x256xf32, #tpu.memory_space<vmem>>, vector<1x1x8x256xf32>
    %448 = vector.shape_cast %447 : vector<1x1x8x256xf32> to vector<8x256xf32>
    %449 = arith.subf %445, %448 : vector<8x256xf32>
    %450 = arith.mulf %449, %449 : vector<8x256xf32>
    %451 = arith.addf %442, %450 : vector<8x256xf32>
    %c29 = arith.constant 29 : index
    %452 = arith.index_cast %c0_i32 : i32 to index
    %c0_222 = arith.constant 0 : index
    %c0_223 = arith.constant 0 : index
    %453 = vector.load %arg1[%c29, %452, %c0_222, %c0_223] : memref<30x1x8x256xf32, #tpu.memory_space<vmem>>, vector<1x1x8x256xf32>
    %454 = vector.shape_cast %453 : vector<1x1x8x256xf32> to vector<8x256xf32>
    %c29_224 = arith.constant 29 : index
    %455 = arith.index_cast %c0_i32 : i32 to index
    %c0_225 = arith.constant 0 : index
    %c0_226 = arith.constant 0 : index
    %456 = vector.load %arg2[%c29_224, %455, %c0_225, %c0_226] : memref<30x1x8x256xf32, #tpu.memory_space<vmem>>, vector<1x1x8x256xf32>
    %457 = vector.shape_cast %456 : vector<1x1x8x256xf32> to vector<8x256xf32>
    %458 = arith.subf %454, %457 : vector<8x256xf32>
    %459 = arith.mulf %458, %458 : vector<8x256xf32>
    %460 = arith.addf %451, %459 : vector<8x256xf32>
    %cst_227 = arith.constant 5.000000e+00 : f32
    %461 = vector.broadcast %cst_227 : f32 to vector<8x256xf32>
    %462 = arith.mulf %461, %7 : vector<8x256xf32>
    %463 = arith.mulf %462, %256 : vector<8x256xf32>
    %464 = arith.mulf %7, %267 : vector<8x256xf32>
    %465 = arith.addf %463, %464 : vector<8x256xf32>
    %cst_228 = arith.constant 5.000000e-01 : f32
    %466 = vector.broadcast %cst_228 : f32 to vector<8x256xf32>
    %467 = arith.mulf %466, %279 : vector<8x256xf32>
    %468 = arith.addf %465, %467 : vector<8x256xf32>
    %469 = arith.mulf %7, %460 : vector<8x256xf32>
    %470 = arith.addf %468, %469 : vector<8x256xf32>
    %471 = arith.addf %0, %470 : vector<8x256xf32>
    %c1_i32 = arith.constant 1 : i32
    %472 = vector.shape_cast %471 : vector<8x256xf32> to vector<1x8x256xf32>
    %cst_229 = arith.constant dense<0.000000e+00> : vector<1xf32>
    %473 = vector.multi_reduction <add>, %472, %cst_229 [1, 2] : vector<1x8x256xf32> to vector<1xf32>
    %474 = vector.shape_cast %473 : vector<1xf32> to vector<1x1x1xf32>
    %475 = vector.extract %474[0, 0, 0] : f32 from vector<1x1x1xf32>
    %c0_230 = arith.constant 0 : index
    %c0_231 = arith.constant 0 : index
    %476 = memref.load %arg3[%c0_230, %c0_231] : memref<1x1xf32, #tpu.memory_space<smem>>
    memref.store %475, %arg3[%c0_230, %c0_231] : memref<1x1xf32, #tpu.memory_space<smem>>
    return
  }
  func.func @transform_0(%arg0: i32) -> (i32, i32, i32, i32) {
    %c0_i32 = arith.constant 0 : i32
    %c0_i32_0 = arith.constant 0 : i32
    %c0_i32_1 = arith.constant 0 : i32
    %c0_i32_2 = arith.constant 0 : i32
    return %c0_i32, %arg0, %c0_i32_0, %c0_i32_1 : i32, i32, i32, i32
  }
  func.func @transform_1(%arg0: i32) -> (i32, i32, i32, i32) {
    %c0_i32 = arith.constant 0 : i32
    %c0_i32_0 = arith.constant 0 : i32
    %c0_i32_1 = arith.constant 0 : i32
    %c0_i32_2 = arith.constant 0 : i32
    return %c0_i32, %arg0, %c0_i32_0, %c0_i32_1 : i32, i32, i32, i32
  }
  func.func @transform_2(%arg0: i32) -> (i32, i32) {
    %c0_i32 = arith.constant 0 : i32
    %c0_i32_0 = arith.constant 0 : i32
    return %arg0, %c0_i32 : i32, i32
  }
}

</mosaic_0001>

<llo_original>
// kernel: yolo_loss_pallas.1
$region0: #{yolo_loss_pallas.1}
  #allocation0 [shape = 'u32[]', space=smem, size = 0x4, offset = 0x4, fixed_abs, tag = 'smem constant byte address 0x4 - core index']
  #allocation1 [shape = 'u32[144,128]{1,0:T(1,128)}', space=vmem, size = 0x12000, scoped, tag = 'internal scratch']
  %s0 = inlined_call_operand.vmem [shape: f32[30,1,8,256], index: 0, kind: input, shape index: {}]
  %s1 = inlined_call_operand.vmem [shape: f32[30,1,8,256], index: 1, kind: input, shape index: {}]
  %s2 = inlined_call_operand.hbm [shape: f32[1,1], index: 2, kind: output, shape index: {}]
  %s3 = sld [smem:[#allocation0]]
  $region18: #{yolo_loss_pallas.1} parent=0
    _
  %s5 = ssub.s32 1, %s3
  %s6 = scalar_select 0, %s5, %s3
  $region1: #{yolo_loss_pallas.1} parent=0
    #allocation2 [shape = 'u8[512]{0}', space=smem, size = 0x200, scoped, tag = 'output window, operand 0, single buffered']
    #allocation3 [shape = 's32[1]{0}', space=sflag, size = 0x4, scoped, tag = 'scoped memory for yolo_loss_pallas.1']
    %7 = vsyncpa [#allocation3], 0
    // Predicated region
    $region2: #{yolo_loss_pallas.1} parent=1 // pred_check
      _
    $region3: #{yolo_loss_pallas.1} parent=1 // pred_check_branch
      %9 = sbr.rel (0) target = $region5
    $region4: #{yolo_loss_pallas.1} parent=1 // pred_region
      _
    $region5: #{yolo_loss_pallas.1} parent=1 // pred_fallthru
      _
    // Predicated region
    $region6: #{yolo_loss_pallas.1} parent=1 // pred_check
      _
    $region7: #{yolo_loss_pallas.1} parent=1 // pred_check_branch
      %11 = sbr.rel (0) target = $region9
    $region8: #{yolo_loss_pallas.1} parent=1 // pred_region
      _
    $region9: #{yolo_loss_pallas.1} parent=1 // pred_fallthru
      _
    %s12 = scalar_lea.vmem %s1, 64
    %v13 = vld [vmem:[%s12] sm:$0xff]
    %v14 = vld [vmem:[%s12 + $0x8] sm:$0xff]
    %vm15 = vcmp.gt.f32.partialorder %v13, 0.0
    %vm16 = vcmp.gt.f32.partialorder %v14, 0.0
    %v17 = vsel %vm15, 1, 0
    %v18 = vsel %vm16, 1, 0
    %v19 = vcvt.s32.f32 %v17
    %v20 = vcvt.s32.f32 %v18
    %v21 = vld [vmem:[%s0] sm:$0xff]
    %v22 = vld [vmem:[%s0 + $0x8] sm:$0xff]
    %s23 = scalar_lea.vmem %s0, 16
    %v24 = vld [vmem:[%s23] sm:$0xff]
    %v25 = vld [vmem:[%s23 + $0x8] sm:$0xff]
    %s26 = scalar_lea.vmem %s0, 32
    %v27 = vld [vmem:[%s26] sm:$0xff]
    %v28 = vld [vmem:[%s26 + $0x8] sm:$0xff]
    %s29 = scalar_lea.vmem %s0, 48
    %v30 = vld [vmem:[%s29] sm:$0xff]
    %v31 = vld [vmem:[%s29 + $0x8] sm:$0xff]
    %v32 = vld [vmem:[%s1] sm:$0xff]
    %v33 = vld [vmem:[%s1 + $0x8] sm:$0xff]
    %s34 = scalar_lea.vmem %s1, 16
    %v35 = vld [vmem:[%s34] sm:$0xff]
    %v36 = vld [vmem:[%s34 + $0x8] sm:$0xff]
    %s37 = scalar_lea.vmem %s1, 32
    %v38 = vld [vmem:[%s37] sm:$0xff]
    %v39 = vld [vmem:[%s37 + $0x8] sm:$0xff]
    %s40 = scalar_lea.vmem %s1, 48
    %v41 = vld [vmem:[%s40] sm:$0xff]
    %v42 = vld [vmem:[%s40 + $0x8] sm:$0xff]
    %v43 = vmul.f32 %v21, 0.14285715
    %v44 = vmul.f32 %v22, 0.14285715
    %v45 = vmul.f32 %v24, 0.14285715
    %v46 = vmul.f32 %v25, 0.14285715
    %v47 = vmul.f32 %v32, 0.14285715
    %v48 = vmul.f32 %v33, 0.14285715
    %v49 = vmul.f32 %v35, 0.14285715
    %v50 = vmul.f32 %v36, 0.14285715
    %v51 = vmul.f32 %v27, 0.5
    %v52 = vmul.f32 %v28, 0.5
    %v53 = vsub.f32 %v43, %v51
    %v54 = vsub.f32 %v44, %v52
    %v55 = vadd.f32 %v43, %v51
    %v56 = vadd.f32 %v44, %v52
    %v57 = vmul.f32 %v30, 0.5
    %v58 = vmul.f32 %v31, 0.5
    %v59 = vsub.f32 %v45, %v57
    %v60 = vsub.f32 %v46, %v58
    %v61 = vadd.f32 %v45, %v57
    %v62 = vadd.f32 %v46, %v58
    %v63 = vmul.f32 %v38, 0.5
    %v64 = vmul.f32 %v39, 0.5
    %v65 = vsub.f32 %v47, %v63
    %v66 = vsub.f32 %v48, %v64
    %v67 = vadd.f32 %v47, %v63
    %v68 = vadd.f32 %v48, %v64
    %v69 = vmul.f32 %v41, 0.5
    %v70 = vmul.f32 %v42, 0.5
    %v71 = vsub.f32 %v49, %v69
    %v72 = vsub.f32 %v50, %v70
    %v73 = vadd.f32 %v49, %v69
    %v74 = vadd.f32 %v50, %v70
    %v75 = vmin.f32 %v55, %v67
    %v76 = vmin.f32 %v56, %v68
    %v77 = vmax.f32 %v53, %v65
    %v78 = vmax.f32 %v54, %v66
    %v79 = vsub.f32 %v75, %v77
    %v80 = vsub.f32 %v76, %v78
    %v81 = vmax.f32 %v79, 0.0
    %v82 = vmax.f32 %v80, 0.0
    %v83 = vmin.f32 %v61, %v73
    %v84 = vmin.f32 %v62, %v74
    %v85 = vmax.f32 %v59, %v71
    %v86 = vmax.f32 %v60, %v72
    %v87 = vsub.f32 %v83, %v85
    %v88 = vsub.f32 %v84, %v86
    %v89 = vmax.f32 %v87, 0.0
    %v90 = vmax.f32 %v88, 0.0
    %v91 = vmul.f32 %v81, %v89
    %v92 = vmul.f32 %v82, %v90
    %v93 = vsub.f32 %v55, %v53
    %v94 = vsub.f32 %v56, %v54
    %v95 = vsub.f32 %v61, %v59
    %v96 = vsub.f32 %v62, %v60
    %v97 = vmul.f32 %v93, %v95
    %v98 = vmul.f32 %v94, %v96
    %v99 = vsub.f32 %v67, %v65
    %v100 = vsub.f32 %v68, %v66
    %v101 = vsub.f32 %v73, %v71
    %v102 = vsub.f32 %v74, %v72
    %v103 = vmul.f32 %v99, %v101
    %v104 = vmul.f32 %v100, %v102
    %v105 = vadd.f32 %v97, %v103
    %v106 = vadd.f32 %v98, %v104
    %v107 = vsub.f32 %v105, %v91
    %v108 = vsub.f32 %v106, %v92
    %v109 = vadd.f32 %v107, 1e-06
    %v110 = vadd.f32 %v108, 1e-06
    %v111 = vrcp.pop %v109
    %v112 = vmul.f32 %v91, %v111
    %v113 = vrcp.pop %v110
    %v114 = vmul.f32 %v92, %v113
    %s115 = scalar_lea.vmem %s0, 80
    %v116 = vld [vmem:[%s115] sm:$0xff]
    %v117 = vld [vmem:[%s115 + $0x8] sm:$0xff]
    %s118 = scalar_lea.vmem %s0, 96
    %v119 = vld [vmem:[%s118] sm:$0xff]
    %v120 = vld [vmem:[%s118 + $0x8] sm:$0xff]
    %s121 = scalar_lea.vmem %s0, 112
    %v122 = vld [vmem:[%s121] sm:$0xff]
    %v123 = vld [vmem:[%s121 + $0x8] sm:$0xff]
    %s124 = scalar_lea.vmem %s0, 128
    %v125 = vld [vmem:[%s124] sm:$0xff]
    %v126 = vld [vmem:[%s124 + $0x8] sm:$0xff]
    %s127 = scalar_lea.vmem %s1, 80
    %v128 = vld [vmem:[%s127] sm:$0xff]
    %v129 = vld [vmem:[%s127 + $0x8] sm:$0xff]
    %s130 = scalar_lea.vmem %s1, 96
    %v131 = vld [vmem:[%s130] sm:$0xff]
    %v132 = vld [vmem:[%s130 + $0x8] sm:$0xff]
    %s133 = scalar_lea.vmem %s1, 112
    %v134 = vld [vmem:[%s133] sm:$0xff]
    %v135 = vld [vmem:[%s133 + $0x8] sm:$0xff]
    %s136 = scalar_lea.vmem %s1, 128
    %v137 = vld [vmem:[%s136] sm:$0xff]
    %v138 = vld [vmem:[%s136 + $0x8] sm:$0xff]
    %v139 = vmul.f32 %v116, 0.14285715
    %v140 = vmul.f32 %v117, 0.14285715
    %v141 = vmul.f32 %v119, 0.14285715
    %v142 = vmul.f32 %v120, 0.14285715
    %v143 = vmul.f32 %v128, 0.14285715
    %v144 = vmul.f32 %v129, 0.14285715
    %v145 = vmul.f32 %v131, 0.14285715
    %v146 = vmul.f32 %v132, 0.14285715
    %v147 = vmul.f32 %v122, 0.5
    %v148 = vmul.f32 %v123, 0.5
    %v149 = vsub.f32 %v139, %v147
    %v150 = vsub.f32 %v140, %v148
    %v151 = vadd.f32 %v139, %v147
    %v152 = vadd.f32 %v140, %v148
    %v153 = vmul.f32 %v125, 0.5
    %v154 = vmul.f32 %v126, 0.5
    %v155 = vsub.f32 %v141, %v153
    %v156 = vsub.f32 %v142, %v154
    %v157 = vadd.f32 %v141, %v153
    %v158 = vadd.f32 %v142, %v154
    %v159 = vmul.f32 %v134, 0.5
    %v160 = vmul.f32 %v135, 0.5
    %v161 = vsub.f32 %v143, %v159
    %v162 = vsub.f32 %v144, %v160
    %v163 = vadd.f32 %v143, %v159
    %v164 = vadd.f32 %v144, %v160
    %v165 = vmul.f32 %v137, 0.5
    %v166 = vmul.f32 %v138, 0.5
    %v167 = vsub.f32 %v145, %v165
    %v168 = vsub.f32 %v146, %v166
    %v169 = vadd.f32 %v145, %v165
    %v170 = vadd.f32 %v146, %v166
    %v171 = vmin.f32 %v151, %v163
    %v172 = vmin.f32 %v152, %v164
    %v173 = vmax.f32 %v149, %v161
    %v174 = vmax.f32 %v150, %v162
    %v175 = vsub.f32 %v171, %v173
    %v176 = vsub.f32 %v172, %v174
    %v177 = vmax.f32 %v175, 0.0
    %v178 = vmax.f32 %v176, 0.0
    %v179 = vmin.f32 %v157, %v169
    %v180 = vmin.f32 %v158, %v170
    %v181 = vmax.f32 %v155, %v167
    %v182 = vmax.f32 %v156, %v168
    %v183 = vsub.f32 %v179, %v181
    %v184 = vsub.f32 %v180, %v182
    %v185 = vmax.f32 %v183, 0.0
    %v186 = vmax.f32 %v184, 0.0
    %v187 = vmul.f32 %v177, %v185
    %v188 = vmul.f32 %v178, %v186
    %v189 = vsub.f32 %v151, %v149
    %v190 = vsub.f32 %v152, %v150
    %v191 = vsub.f32 %v157, %v155
    %v192 = vsub.f32 %v158, %v156
    %v193 = vmul.f32 %v189, %v191
    %v194 = vmul.f32 %v190, %v192
    %v195 = vsub.f32 %v163, %v161
    %v196 = vsub.f32 %v164, %v162
    %v197 = vsub.f32 %v169, %v167
    %v198 = vsub.f32 %v170, %v168
    %v199 = vmul.f32 %v195, %v197
    %v200 = vmul.f32 %v196, %v198
    %v201 = vadd.f32 %v193, %v199
    %v202 = vadd.f32 %v194, %v200
    %v203 = vsub.f32 %v201, %v187
    %v204 = vsub.f32 %v202, %v188
    %v205 = vadd.f32 %v203, 1e-06
    %v206 = vadd.f32 %v204, 1e-06
    %v207 = vrcp.pop %v205
    %v208 = vmul.f32 %v187, %v207
    %v209 = vrcp.pop %v206
    %v210 = vmul.f32 %v188, %v209
    %vm211 = vcmp.gt.f32.partialorder %v208, %v112
    %vm212 = vcmp.gt.f32.partialorder %v210, %v114
    %v213 = vsel %vm211, 1, 0
    %v214 = vsel %vm212, 1, 0
    %v215 = vcvt.s32.f32 %v213
    %v216 = vcvt.s32.f32 %v214
    %v217 = vsub.f32 1.0, %v215
    %v218 = vsub.f32 1.0, %v216
    %v219 = vmax.f32 %v112, %v208
    %v220 = vmax.f32 %v114, %v210
    %v221 = vmul.f32 %v217, %v21
    %v222 = vmul.f32 %v218, %v22
    %v223 = vmul.f32 %v215, %v116
    %v224 = vmul.f32 %v216, %v117
    %v225 = vadd.f32 %v221, %v223
    %v226 = vadd.f32 %v222, %v224
    %v227 = vmul.f32 %v217, %v32
    %v228 = vmul.f32 %v218, %v33
    %v229 = vmul.f32 %v215, %v128
    %v230 = vmul.f32 %v216, %v129
    %v231 = vadd.f32 %v227, %v229
    %v232 = vadd.f32 %v228, %v230
    %v233 = vsub.f32 %v225, %v231
    %v234 = vsub.f32 %v226, %v232
    %v235 = vmul.f32 %v217, %v24
    %v236 = vmul.f32 %v218, %v25
    %v237 = vmul.f32 %v215, %v119
    %v238 = vmul.f32 %v216, %v120
    %v239 = vadd.f32 %v235, %v237
    %v240 = vadd.f32 %v236, %v238
    %v241 = vmul.f32 %v217, %v35
    %v242 = vmul.f32 %v218, %v36
    %v243 = vmul.f32 %v215, %v131
    %v244 = vmul.f32 %v216, %v132
    %v245 = vadd.f32 %v241, %v243
    %v246 = vadd.f32 %v242, %v244
    %v247 = vsub.f32 %v239, %v245
    %v248 = vsub.f32 %v240, %v246
    %v249 = vmul.f32 %v217, %v27
    %v250 = vmul.f32 %v218, %v28
    %v251 = vmul.f32 %v215, %v122
    %v252 = vmul.f32 %v216, %v123
    %v253 = vadd.f32 %v249, %v251
    %v254 = vadd.f32 %v250, %v252
    %v255 = vrsqrt.pop %v253
    %v256 = vmul.f32 %v253, %v255
    %vm257 = vcmp.eq.f32.partialorder %v253, inf
    %v258 = vsel %vm257, %v253, %v256
    %vm259 = vcmp.eq.f32.partialorder %v253, 0.0
    %v260 = vand.u32 %v253, 2147483648
    %v261 = vsel %vm259, %v260, %v258
    %v262 = vrsqrt.pop %v254
    %v263 = vmul.f32 %v254, %v262
    %vm264 = vcmp.eq.f32.partialorder %v254, inf
    %v265 = vsel %vm264, %v254, %v263
    %vm266 = vcmp.eq.f32.partialorder %v254, 0.0
    %v267 = vand.u32 %v254, 2147483648
    %v268 = vsel %vm266, %v267, %v265
    %v269 = vmul.f32 %v217, %v38
    %v270 = vmul.f32 %v218, %v39
    %v271 = vmul.f32 %v215, %v134
    %v272 = vmul.f32 %v216, %v135
    %v273 = vadd.f32 %v269, %v271
    %v274 = vadd.f32 %v270, %v272
    %v275 = vrsqrt.pop %v273
    %v276 = vmul.f32 %v273, %v275
    %vm277 = vcmp.eq.f32.partialorder %v273, inf
    %v278 = vsel %vm277, %v273, %v276
    %vm279 = vcmp.eq.f32.partialorder %v273, 0.0
    %v280 = vand.u32 %v273, 2147483648
    %v281 = vsel %vm279, %v280, %v278
    %v282 = vrsqrt.pop %v274
    %v283 = vmul.f32 %v274, %v282
    %vm284 = vcmp.eq.f32.partialorder %v274, inf
    %v285 = vsel %vm284, %v274, %v283
    %vm286 = vcmp.eq.f32.partialorder %v274, 0.0
    %v287 = vand.u32 %v274, 2147483648
    %v288 = vsel %vm286, %v287, %v285
    %v289 = vsub.f32 %v261, %v281
    %v290 = vsub.f32 %v268, %v288
    %v291 = vmul.f32 %v217, %v30
    %v292 = vmul.f32 %v218, %v31
    %v293 = vmul.f32 %v215, %v125
    %v294 = vmul.f32 %v216, %v126
    %v295 = vadd.f32 %v291, %v293
    %v296 = vadd.f32 %v292, %v294
    %v297 = vrsqrt.pop %v295
    %v298 = vmul.f32 %v295, %v297
    %vm299 = vcmp.eq.f32.partialorder %v295, inf
    %v300 = vsel %vm299, %v295, %v298
    %vm301 = vcmp.eq.f32.partialorder %v295, 0.0
    %v302 = vand.u32 %v295, 2147483648
    %v303 = vsel %vm301, %v302, %v300
    %v304 = vrsqrt.pop %v296
    %v305 = vmul.f32 %v296, %v304
    %vm306 = vcmp.eq.f32.partialorder %v296, inf
    %v307 = vsel %vm306, %v296, %v305
    %vm308 = vcmp.eq.f32.partialorder %v296, 0.0
    %v309 = vand.u32 %v296, 2147483648
    %v310 = vsel %vm308, %v309, %v307
    %v311 = vmul.f32 %v217, %v41
    %v312 = vmul.f32 %v218, %v42
    %v313 = vmul.f32 %v215, %v137
    %v314 = vmul.f32 %v216, %v138
    %v315 = vadd.f32 %v311, %v313
    %v316 = vadd.f32 %v312, %v314
    %v317 = vrsqrt.pop %v315
    %v318 = vmul.f32 %v315, %v317
    %vm319 = vcmp.eq.f32.partialorder %v315, inf
    %v320 = vsel %vm319, %v315, %v318
    %vm321 = vcmp.eq.f32.partialorder %v315, 0.0
    %v322 = vand.u32 %v315, 2147483648
    %v323 = vsel %vm321, %v322, %v320
    %v324 = vrsqrt.pop %v316
    %v325 = vmul.f32 %v316, %v324
    %vm326 = vcmp.eq.f32.partialorder %v316, inf
    %v327 = vsel %vm326, %v316, %v325
    %vm328 = vcmp.eq.f32.partialorder %v316, 0.0
    %v329 = vand.u32 %v316, 2147483648
    %v330 = vsel %vm328, %v329, %v327
    %v331 = vsub.f32 %v303, %v323
    %v332 = vsub.f32 %v310, %v330
    %v333 = vmul.f32 %v233, %v233
    %v334 = vmul.f32 %v234, %v234
    %v335 = vmul.f32 %v247, %v247
    %v336 = vmul.f32 %v248, %v248
    %v337 = vadd.f32 %v333, %v335
    %v338 = vadd.f32 %v334, %v336
    %v339 = vmul.f32 %v289, %v289
    %v340 = vmul.f32 %v290, %v290
    %v341 = vadd.f32 %v337, %v339
    %v342 = vadd.f32 %v338, %v340
    %v343 = vmul.f32 %v331, %v331
    %v344 = vmul.f32 %v332, %v332
    %v345 = vadd.f32 %v341, %v343
    %v346 = vadd.f32 %v342, %v344
    %s347 = scalar_lea.vmem %s0, 64
    %v348 = vld [vmem:[%s347] sm:$0xff]
    %v349 = vld [vmem:[%s347 + $0x8] sm:$0xff]
    %v350 = vmul.f32 %v217, %v348
    %v351 = vmul.f32 %v218, %v349
    %s352 = scalar_lea.vmem %s0, 144
    %v353 = vld [vmem:[%s352] sm:$0xff]
    %v354 = vld [vmem:[%s352 + $0x8] sm:$0xff]
    %v355 = vmul.f32 %v215, %v353
    %v356 = vmul.f32 %v216, %v354
    %v357 = vadd.f32 %v350, %v355
    %v358 = vadd.f32 %v351, %v356
    %v359 = vsub.f32 %v219, %v357
    %v360 = vsub.f32 %v220, %v358
    %v361 = vmul.f32 %v359, %v359
    %v362 = vmul.f32 %v360, %v360
    %v363 = vmul.f32 %v348, %v348
    %v364 = vmul.f32 %v349, %v349
    %v365 = vmul.f32 %v353, %v353
    %v366 = vmul.f32 %v354, %v354
    %v367 = vadd.f32 %v363, %v365
    %v368 = vadd.f32 %v364, %v366
    %v369 = vmul.f32 %v357, %v357
    %v370 = vmul.f32 %v358, %v358
    %v371 = vmul.f32 %v19, %v369
    %v372 = vmul.f32 %v20, %v370
    %v373 = vsub.f32 %v367, %v371
    %v374 = vsub.f32 %v368, %v372
    %s375 = scalar_lea.vmem %s0, 160
    %v376 = vld [vmem:[%s375] sm:$0xff]
    %v377 = vld [vmem:[%s375 + $0x8] sm:$0xff]
    %s378 = scalar_lea.vmem %s1, 160
    %v379 = vld [vmem:[%s378] sm:$0xff]
    %v380 = vld [vmem:[%s378 + $0x8] sm:$0xff]
    %v381 = vsub.f32 %v376, %v379
    %v382 = vsub.f32 %v377, %v380
    %v383 = vmul.f32 %v381, %v381
    %v384 = vmul.f32 %v382, %v382
    %v385 = vadd.f32 %v383, 0.0
    %v386 = vadd.f32 %v384, 0.0
    %s387 = scalar_lea.vmem %s0, 176
    %v388 = vld [vmem:[%s387] sm:$0xff]
    %v389 = vld [vmem:[%s387 + $0x8] sm:$0xff]
    %s390 = scalar_lea.vmem %s1, 176
    %v391 = vld [vmem:[%s390] sm:$0xff]
    %v392 = vld [vmem:[%s390 + $0x8] sm:$0xff]
    %v393 = vsub.f32 %v388, %v391
    %v394 = vsub.f32 %v389, %v392
    %v395 = vmul.f32 %v393, %v393
    %v396 = vmul.f32 %v394, %v394
    %v397 = vadd.f32 %v385, %v395
    %v398 = vadd.f32 %v386, %v396
    %s399 = scalar_lea.vmem %s0, 192
    %v400 = vld [vmem:[%s399] sm:$0xff]
    %v401 = vld [vmem:[%s399 + $0x8] sm:$0xff]
    %s402 = scalar_lea.vmem %s1, 192
    %v403 = vld [vmem:[%s402] sm:$0xff]
    %v404 = vld [vmem:[%s402 + $0x8] sm:$0xff]
    %v405 = vsub.f32 %v400, %v403
    %v406 = vsub.f32 %v401, %v404
    %v407 = vmul.f32 %v405, %v405
    %v408 = vmul.f32 %v406, %v406
    %v409 = vadd.f32 %v397, %v407
    %v410 = vadd.f32 %v398, %v408
    %s411 = scalar_lea.vmem %s0, 208
    %v412 = vld [vmem:[%s411] sm:$0xff]
    %v413 = vld [vmem:[%s411 + $0x8] sm:$0xff]
    %s414 = scalar_lea.vmem %s1, 208
    %v415 = vld [vmem:[%s414] sm:$0xff]
    %v416 = vld [vmem:[%s414 + $0x8] sm:$0xff]
    %v417 = vsub.f32 %v412, %v415
    %v418 = vsub.f32 %v413, %v416
    %v419 = vmul.f32 %v417, %v417
    %v420 = vmul.f32 %v418, %v418
    %v421 = vadd.f32 %v409, %v419
    %v422 = vadd.f32 %v410, %v420
    %s423 = scalar_lea.vmem %s0, 224
    %v424 = vld [vmem:[%s423] sm:$0xff]
    %v425 = vld [vmem:[%s423 + $0x8] sm:$0xff]
    %s426 = scalar_lea.vmem %s1, 224
    %v427 = vld [vmem:[%s426] sm:$0xff]
    %v428 = vld [vmem:[%s426 + $0x8] sm:$0xff]
    %v429 = vsub.f32 %v424, %v427
    %v430 = vsub.f32 %v425, %v428
    %v431 = vmul.f32 %v429, %v429
    %v432 = vmul.f32 %v430, %v430
    %v433 = vadd.f32 %v421, %v431
    %v434 = vadd.f32 %v422, %v432
    %s435 = scalar_lea.vmem %s0, 240
    %v436 = vld [vmem:[%s435] sm:$0xff]
    %v437 = vld [vmem:[%s435 + $0x8] sm:$0xff]
    %s438 = scalar_lea.vmem %s1, 240
    %v439 = vld [vmem:[%s438] sm:$0xff]
    %v440 = vld [vmem:[%s438 + $0x8] sm:$0xff]
    %v441 = vsub.f32 %v436, %v439
    %v442 = vsub.f32 %v437, %v440
    %v443 = vmul.f32 %v441, %v441
    %v444 = vmul.f32 %v442, %v442
    %v445 = vadd.f32 %v433, %v443
    %v446 = vadd.f32 %v434, %v444
    %s447 = scalar_lea.vmem %s0, 256
    %v448 = vld [vmem:[%s447] sm:$0xff]
    %v449 = vld [vmem:[%s447 + $0x8] sm:$0xff]
    %s450 = scalar_lea.vmem %s1, 256
    %v451 = vld [vmem:[%s450] sm:$0xff]
    %v452 = vld [vmem:[%s450 + $0x8] sm:$0xff]
    %v453 = vsub.f32 %v448, %v451
    %v454 = vsub.f32 %v449, %v452
    %v455 = vmul.f32 %v453, %v453
    %v456 = vmul.f32 %v454, %v454
    %v457 = vadd.f32 %v445, %v455
    %v458 = vadd.f32 %v446, %v456
    %s459 = scalar_lea.vmem %s0, 272
    %v460 = vld [vmem:[%s459] sm:$0xff]
    %v461 = vld [vmem:[%s459 + $0x8] sm:$0xff]
    %s462 = scalar_lea.vmem %s1, 272
    %v463 = vld [vmem:[%s462] sm:$0xff]
    %v464 = vld [vmem:[%s462 + $0x8] sm:$0xff]
    %v465 = vsub.f32 %v460, %v463
    %v466 = vsub.f32 %v461, %v464
    %v467 = vmul.f32 %v465, %v465
    %v468 = vmul.f32 %v466, %v466
    %v469 = vadd.f32 %v457, %v467
    %v470 = vadd.f32 %v458, %v468
    %s471 = scalar_lea.vmem %s0, 288
    %v472 = vld [vmem:[%s471] sm:$0xff]
    %v473 = vld [vmem:[%s471 + $0x8] sm:$0xff]
    %s474 = scalar_lea.vmem %s1, 288
    %v475 = vld [vmem:[%s474] sm:$0xff]
    %v476 = vld [vmem:[%s474 + $0x8] sm:$0xff]
    %v477 = vsub.f32 %v472, %v475
    %v478 = vsub.f32 %v473, %v476
    %v479 = vmul.f32 %v477, %v477
    %v480 = vmul.f32 %v478, %v478
    %v481 = vadd.f32 %v469, %v479
    %v482 = vadd.f32 %v470, %v480
    %s483 = scalar_lea.vmem %s0, 304
    %v484 = vld [vmem:[%s483] sm:$0xff]
    %v485 = vld [vmem:[%s483 + $0x8] sm:$0xff]
    %s486 = scalar_lea.vmem %s1, 304
    %v487 = vld [vmem:[%s486] sm:$0xff]
    %v488 = vld [vmem:[%s486 + $0x8] sm:$0xff]
    %v489 = vsub.f32 %v484, %v487
    %v490 = vsub.f32 %v485, %v488
    %v491 = vmul.f32 %v489, %v489
    %v492 = vmul.f32 %v490, %v490
    %v493 = vadd.f32 %v481, %v491
    %v494 = vadd.f32 %v482, %v492
    %s495 = scalar_lea.vmem %s0, 320
    %v496 = vld [vmem:[%s495] sm:$0xff]
    %v497 = vld [vmem:[%s495 + $0x8] sm:$0xff]
    %s498 = scalar_lea.vmem %s1, 320
    %v499 = vld [vmem:[%s498] sm:$0xff]
    %v500 = vld [vmem:[%s498 + $0x8] sm:$0xff]
    %v501 = vsub.f32 %v496, %v499
    %v502 = vsub.f32 %v497, %v500
    %v503 = vmul.f32 %v501, %v501
    %v504 = vmul.f32 %v502, %v502
    %v505 = vadd.f32 %v493, %v503
    %v506 = vadd.f32 %v494, %v504
    %s507 = scalar_lea.vmem %s0, 336
    %v508 = vld [vmem:[%s507] sm:$0xff]
    %v509 = vld [vmem:[%s507 + $0x8] sm:$0xff]
    %s510 = scalar_lea.vmem %s1, 336
    %v511 = vld [vmem:[%s510] sm:$0xff]
    %v512 = vld [vmem:[%s510 + $0x8] sm:$0xff]
    %v513 = vsub.f32 %v508, %v511
    %v514 = vsub.f32 %v509, %v512
    %v515 = vmul.f32 %v513, %v513
    %v516 = vmul.f32 %v514, %v514
    %v517 = vadd.f32 %v505, %v515
    %v518 = vadd.f32 %v506, %v516
    %s519 = scalar_lea.vmem %s0, 352
    %v520 = vld [vmem:[%s519] sm:$0xff]
    %v521 = vld [vmem:[%s519 + $0x8] sm:$0xff]
    %s522 = scalar_lea.vmem %s1, 352
    %v523 = vld [vmem:[%s522] sm:$0xff]
    %v524 = vld [vmem:[%s522 + $0x8] sm:$0xff]
    %v525 = vsub.f32 %v520, %v523
    %v526 = vsub.f32 %v521, %v524
    %v527 = vmul.f32 %v525, %v525
    %v528 = vmul.f32 %v526, %v526
    %v529 = vadd.f32 %v517, %v527
    %v530 = vadd.f32 %v518, %v528
    %s531 = scalar_lea.vmem %s0, 368
    %v532 = vld [vmem:[%s531] sm:$0xff]
    %v533 = vld [vmem:[%s531 + $0x8] sm:$0xff]
    %s534 = scalar_lea.vmem %s1, 368
    %v535 = vld [vmem:[%s534] sm:$0xff]
    %v536 = vld [vmem:[%s534 + $0x8] sm:$0xff]
    %v537 = vsub.f32 %v532, %v535
    %v538 = vsub.f32 %v533, %v536
    %v539 = vmul.f32 %v537, %v537
    %v540 = vmul.f32 %v538, %v538
    %v541 = vadd.f32 %v529, %v539
    %v542 = vadd.f32 %v530, %v540
    %s543 = scalar_lea.vmem %s0, 384
    %v544 = vld [vmem:[%s543] sm:$0xff]
    %v545 = vld [vmem:[%s543 + $0x8] sm:$0xff]
    %s546 = scalar_lea.vmem %s1, 384
    %v547 = vld [vmem:[%s546] sm:$0xff]
    %v548 = vld [vmem:[%s546 + $0x8] sm:$0xff]
    %v549 = vsub.f32 %v544, %v547
    %v550 = vsub.f32 %v545, %v548
    %v551 = vmul.f32 %v549, %v549
    %v552 = vmul.f32 %v550, %v550
    %v553 = vadd.f32 %v541, %v551
    %v554 = vadd.f32 %v542, %v552
    %s555 = scalar_lea.vmem %s0, 400
    %v556 = vld [vmem:[%s555] sm:$0xff]
    %v557 = vld [vmem:[%s555 + $0x8] sm:$0xff]
    %s558 = scalar_lea.vmem %s1, 400
    %v559 = vld [vmem:[%s558] sm:$0xff]
    %v560 = vld [vmem:[%s558 + $0x8] sm:$0xff]
    %v561 = vsub.f32 %v556, %v559
    %v562 = vsub.f32 %v557, %v560
    %v563 = vmul.f32 %v561, %v561
    %v564 = vmul.f32 %v562, %v562
    %v565 = vadd.f32 %v553, %v563
    %v566 = vadd.f32 %v554, %v564
    %s567 = scalar_lea.vmem %s0, 416
    %v568 = vld [vmem:[%s567] sm:$0xff]
    %v569 = vld [vmem:[%s567 + $0x8] sm:$0xff]
    %s570 = scalar_lea.vmem %s1, 416
    %v571 = vld [vmem:[%s570] sm:$0xff]
    %v572 = vld [vmem:[%s570 + $0x8] sm:$0xff]
    %v573 = vsub.f32 %v568, %v571
    %v574 = vsub.f32 %v569, %v572
    %v575 = vmul.f32 %v573, %v573
    %v576 = vmul.f32 %v574, %v574
    %v577 = vadd.f32 %v565, %v575
    %v578 = vadd.f32 %v566, %v576
    %s579 = scalar_lea.vmem %s0, 432
    %v580 = vld [vmem:[%s579] sm:$0xff]
    %v581 = vld [vmem:[%s579 + $0x8] sm:$0xff]
    %s582 = scalar_lea.vmem %s1, 432
    %v583 = vld [vmem:[%s582] sm:$0xff]
    %v584 = vld [vmem:[%s582 + $0x8] sm:$0xff]
    %v585 = vsub.f32 %v580, %v583
    %v586 = vsub.f32 %v581, %v584
    %v587 = vmul.f32 %v585, %v585
    %v588 = vmul.f32 %v586, %v586
    %v589 = vadd.f32 %v577, %v587
    %v590 = vadd.f32 %v578, %v588
    %s591 = scalar_lea.vmem %s0, 448
    %v592 = vld [vmem:[%s591] sm:$0xff]
    %v593 = vld [vmem:[%s591 + $0x8] sm:$0xff]
    %s594 = scalar_lea.vmem %s1, 448
    %v595 = vld [vmem:[%s594] sm:$0xff]
    %v596 = vld [vmem:[%s594 + $0x8] sm:$0xff]
    %v597 = vsub.f32 %v592, %v595
    %v598 = vsub.f32 %v593, %v596
    %v599 = vmul.f32 %v597, %v597
    %v600 = vmul.f32 %v598, %v598
    %v601 = vadd.f32 %v589, %v599
    %v602 = vadd.f32 %v590, %v600
    %s603 = scalar_lea.vmem %s0, 464
    %v604 = vld [vmem:[%s603] sm:$0xff]
    %v605 = vld [vmem:[%s603 + $0x8] sm:$0xff]
    %s606 = scalar_lea.vmem %s1, 464
    %v607 = vld [vmem:[%s606] sm:$0xff]
    %v608 = vld [vmem:[%s606 + $0x8] sm:$0xff]
    %v609 = vsub.f32 %v604, %v607
    %v610 = vsub.f32 %v605, %v608
    %v611 = vmul.f32 %v609, %v609
    %v612 = vmul.f32 %v610, %v610
    %v613 = vadd.f32 %v601, %v611
    %v614 = vadd.f32 %v602, %v612
    %v615 = vmul.f32 %v19, 5.0
    %v616 = vmul.f32 %v20, 5.0
    %v617 = vmul.f32 %v615, %v345
    %v618 = vmul.f32 %v616, %v346
    %v619 = vmul.f32 %v19, %v361
    %v620 = vmul.f32 %v20, %v362
    %v621 = vadd.f32 %v617, %v619
    %v622 = vadd.f32 %v618, %v620
    %v623 = vmul.f32 %v373, 0.5
    %v624 = vmul.f32 %v374, 0.5
    %v625 = vadd.f32 %v621, %v623
    %v626 = vadd.f32 %v622, %v624
    %v627 = vmul.f32 %v19, %v613
    %v628 = vmul.f32 %v20, %v614
    %v629 = vadd.f32 %v625, %v627
    %v630 = vadd.f32 %v626, %v628
    %v631 = vadd.f32 %v629, 0.0
    %v632 = vadd.f32 %v630, 0.0
    %v633 = vadd.f32 %v631, %v632
    %634 = vadd.xlane.f32.xlu0 %v633
    %v635 = vpop.xlane.xlu0 %634
    %v636 = vrot.slane %v635, 4
    %v637 = vadd.f32 %v635, %v636
    %v638 = vrot.slane %v637, 2
    %v639 = vadd.f32 %v637, %v638
    %v640 = vrot.slane %v639, 1
    %v641 = vadd.f32 %v639, %v640
    %s642 = vtos %v641
    %s643 = scalar_lea.smem [#allocation2], 0
    %644 = sst [smem:[%s643]] %s642
    // Predicated region
    $region10: #{yolo_loss_pallas.1} parent=1 // pred_check
      _
    $region11: #{yolo_loss_pallas.1} parent=1 // pred_check_branch
      %646 = sbr.rel (0) target = $region13
    $region12: #{yolo_loss_pallas.1} parent=1 // pred_region
      %s648 = ssub.s32 16, 16
      %649 = vsyncadd [#allocation3], %s648
      %652 = dma.smem_to_hbm [#allocation2], 16, %s2, [#allocation3]
    $region13: #{yolo_loss_pallas.1} parent=1 // pred_fallthru
      _
    // Predicated region
    $region14: #{yolo_loss_pallas.1} parent=1 // pred_check
      _
    $region15: #{yolo_loss_pallas.1} parent=1 // pred_check_branch
      %654 = sbr.rel (0) target = $region17
    $region16: #{yolo_loss_pallas.1} parent=1 // pred_region
      %655 = dma.done [#allocation3], 16
    $region17: #{yolo_loss_pallas.1} parent=1 // pred_fallthru
      _
    %656 = sfence
    %657 = vsyncpa [#allocation3], 1

</llo_original>
